<compile_context>
chip_gen: v7x
topology: tpu7x:2x2x1
jax: 0.10.0
libtpu: 0.0.40
codegen_flags: <defaults>
</compile_context>

<pallas_src>
import functools

import jax
import jax.numpy as jnp
from jax import lax
from jax.experimental import pallas as pl
from jax.experimental.pallas import tpu as pltpu


# ----------------------- Kernel 1: fused 2-layer GCN + classifier -----------------------

def gcn_kernel(a_ref, x_ref, w1_ref, b1_ref, w2_ref, b2_ref, wc_ref, bc_ref,
               f_ref, logits_ref, h_sc, acc1_sc, acc2_sc):
    gcn_pass = pl.program_id(0)          # 0: conv1 ; 1: conv2 + classifier
    tile = pl.program_id(1)              # node-row tile
    kidx = pl.program_id(2)              # contraction (column) tile of A
    nk = pl.num_programs(2)
    tm, tk = a_ref.shape
    row0 = pl.multiple_of(tile * tm, tm)
    col0 = pl.multiple_of(kidx * tk, tk)

    a = a_ref[...]                       # (tm, tk) bf16 block of the normalized adjacency

    @pl.when(gcn_pass == 0)
    def _conv1():
        @pl.when(kidx == 0)
        def _():
            acc1_sc[...] = jnp.zeros_like(acc1_sc)

        acc1_sc[...] += jnp.dot(a, x_ref[...], preferred_element_type=jnp.float32)

        @pl.when(kidx == nk - 1)
        def _():
            agg = acc1_sc[...].astype(jnp.bfloat16)
            h = jnp.dot(agg, w1_ref[...], preferred_element_type=jnp.float32) + b1_ref[...]
            h = jnp.maximum(h, 0.0)      # ReLU in f32; dropout = identity (eval mode)
            h_sc[pl.ds(row0, tm), :] = h.astype(h_sc.dtype)

    @pl.when(gcn_pass == 1)
    def _conv2():
        @pl.when(kidx == 0)
        def _():
            acc2_sc[...] = jnp.zeros_like(acc2_sc)

        acc2_sc[...] += jnp.dot(a, h_sc[pl.ds(col0, tk), :],
                                preferred_element_type=jnp.float32)

        @pl.when(kidx == nk - 1)
        def _():
            agg = acc2_sc[...].astype(jnp.bfloat16)
            f = jnp.dot(agg, w2_ref[...], preferred_element_type=jnp.float32) + b2_ref[...]
            f_ref[...] = f
            logits_ref[...] = (jnp.dot(f.astype(jnp.bfloat16), wc_ref[...],
                                       preferred_element_type=jnp.float32) + bc_ref[...])


# ----------------------- Kernel 2: edge projector (tiled over edges) --------------------

def edge_mlp_kernel(src_ref, dst_ref,                       # scalar-prefetch SMEM edge ids
                    f_ref, we1s_ref, we1d_ref, be1_ref, we2_ref, be2_ref,
                    edge_ref, gsrc_sc, gdst_sc):
    tile = pl.program_id(0)
    te = edge_ref.shape[0]
    base = pl.multiple_of(tile * te, te)

    # Row gather of F[src] / F[dst] from the VMEM-resident F (replaces the O(E*N) one-hot).
    def gather_row(j, carry):
        s = src_ref[base + j]
        d = dst_ref[base + j]
        gsrc_sc[pl.ds(j, 1), :] = f_ref[pl.ds(s, 1), :]
        gdst_sc[pl.ds(j, 1), :] = f_ref[pl.ds(d, 1), :]
        return carry

    lax.fori_loop(0, te, gather_row, 0)

    f_src = gsrc_sc[...].astype(jnp.bfloat16)
    f_dst = gdst_sc[...].astype(jnp.bfloat16)
    he = (jnp.dot(f_src, we1s_ref[...], preferred_element_type=jnp.float32)
          + jnp.dot(f_dst, we1d_ref[...], preferred_element_type=jnp.float32)
          + be1_ref[...])
    he = jnp.maximum(he, 0.0)
    edge_ref[...] = (jnp.dot(he.astype(jnp.bfloat16), we2_ref[...],
                             preferred_element_type=jnp.float32) + be2_ref[...])


# ----------------------------- helpers / wrapper -----------------------------------------

def _round_up(v, m):
    return ((v + m - 1) // m) * m


def _pick_tile(n, cap):
    for cand in (2048, 1024, 512, 256, 128):
        if cand <= cap and n % cand == 0:
            return cand
    return 128


def _pad2(w, rows, cols, dtype):
    out = jnp.zeros((rows, cols), dtype)
    return out.at[: w.shape[0], : w.shape[1]].set(w.astype(dtype))


def _vmem_limit_bytes():
    """Per-generation VMEM budget with ~25% headroom (64 MiB fallback if query fails)."""
    try:
        cap = int(pltpu.get_tpu_info().vmem_capacity_bytes)
    except Exception:
        cap = 64 << 20
    return max(cap - cap // 4, 32 << 20)


def build_norm_adj(edge_index, num_nodes):
    """Dense equivalent of PyG gcn_norm: A[target, source] scatter-added for non-self-loop
    edges, exactly one weight-1 self-loop per node (add_remaining_self_loops), symmetric
    D^-1/2 A D^-1/2 normalization with target (in-)degree."""
    src, dst = edge_index[0], edge_index[1]
    w = jnp.where(src != dst, 1.0, 0.0).astype(jnp.float32)
    a = jnp.zeros((num_nodes, num_nodes), jnp.float32).at[dst, src].add(w)
    a = a + jnp.eye(num_nodes, dtype=jnp.float32)
    deg = a.sum(axis=1)
    dinv = jnp.where(deg > 0.0, lax.rsqrt(deg), 0.0)
    return a * dinv[:, None] * dinv[None, :]


def graph_encoder_forward(params, x, edge_index):
    """Matches GraphEncoder.forward: returns (f, edge_feats, logits, edge_index)."""
    n, d_in = x.shape
    e = edge_index.shape[1]
    hid = params["w1"].shape[1]
    out_dim = params["w2"].shape[1]
    eph = params["we1"].shape[1]
    ncls = params["wc"].shape[1]

    # lane-dense padded sizes (multiples of 128); zero padding keeps the math exact
    n_pad = _round_up(n, 128)
    e_pad = _round_up(e, 128)
    d_p = _round_up(d_in, 128)
    h_p = _round_up(hid, 128)
    o_p = _round_up(out_dim, 128)
    p_p = _round_up(eph, 128)
    c_p = _round_up(ncls, 128)

    vmem_limit = _vmem_limit_bytes()
    tile_budget = (vmem_limit * 4) // 5

    # ---------------- tile sizing (row tile tm, contraction tile tk) ----------------
    tm = _pick_tile(n_pad, 1024)
    tk = _pick_tile(n_pad, 2048)

    def gcn_footprint(tm_, tk_):
        a_blk = 2 * tm_ * tk_ * 2                 # A block, double-buffered, bf16
        x_blk = 2 * tk_ * d_p * 2                 # X block, double-buffered, bf16
        h_res = n_pad * h_p * 2                   # resident H scratch (bf16)
        accs = tm_ * (d_p + h_p) * 4              # f32 accumulators
        outs = 2 * tm_ * (o_p + c_p) * 4          # f / logits blocks, double-buffered
        wts = 2 * ((d_p * h_p + h_p * o_p + o_p * c_p) * 2 + (h_p + o_p + c_p) * 4)
        return a_blk + x_blk + h_res + accs + outs + wts

    while gcn_footprint(tm, tk) > tile_budget and tk > 128:
        tk //= 2
    while gcn_footprint(tm, tk) > tile_budget and tm > 128:
        tm //= 2

    n_row_tiles = n_pad // tm
    n_k_tiles = n_pad // tk

    # ---------------- padded, lane-dense operands ----------------
    a_hat = build_norm_adj(edge_index, n)
    a_p = jnp.zeros((n_pad, n_pad), jnp.bfloat16).at[:n, :n].set(a_hat.astype(jnp.bfloat16))
    x_p = jnp.zeros((n_pad, d_p), jnp.bfloat16).at[:n, :d_in].set(x.astype(jnp.bfloat16))

    w1 = _pad2(params["w1"], d_p, h_p, jnp.bfloat16)
    b1 = _pad2(params["b1"], 1, h_p, jnp.float32)
    w2 = _pad2(params["w2"], h_p, o_p, jnp.bfloat16)
    b2 = _pad2(params["b2"], 1, o_p, jnp.float32)
    wc = _pad2(params["wc"], o_p, c_p, jnp.bfloat16)
    bc = _pad2(params["bc"], 1, c_p, jnp.float32)

    resident = lambda p, i, k: (0, 0)
    gcn_grid = pltpu.PrefetchScalarGridSpec(
        num_scalar_prefetch=0,
        grid=(2, n_row_tiles, n_k_tiles),
        in_specs=[
            pl.BlockSpec((tm, tk), lambda p, i, k: (i, k)),             # A_hat block (bf16)
            pl.BlockSpec((tk, d_p), lambda p, i, k: (k * (1 - p), 0)),  # X block (pass 0 only)
            pl.BlockSpec((d_p, h_p), resident),                         # W1
            pl.BlockSpec((1, h_p), resident),                           # b1
            pl.BlockSpec((h_p, o_p), resident),                         # W2
            pl.BlockSpec((1, o_p), resident),                           # b2
            pl.BlockSpec((o_p, c_p), resident),                         # Wc
            pl.BlockSpec((1, c_p), resident),                           # bc
        ],
        out_specs=(
            # pinned to block 0 in pass 0 (nothing written there), advances with tile in pass 1
            pl.BlockSpec((tm, o_p), lambda p, i, k: (i * p, 0)),        # F
            pl.BlockSpec((tm, c_p), lambda p, i, k: (i * p, 0)),        # logits
        ),
        scratch_shapes=[
            pltpu.VMEM((n_pad, h_p), jnp.bfloat16),   # H: conv1 output, feeds pass-1 aggregation
            pltpu.VMEM((tm, d_p), jnp.float32),       # A@X accumulator
            pltpu.VMEM((tm, h_p), jnp.float32),       # A@H accumulator
        ],
    )

    gcn_cost = pl.CostEstimate(
        flops=int(4 * n_pad * n_pad * (d_p + h_p)
                  + 2 * n_pad * (d_p * h_p + h_p * o_p + o_p * c_p)),
        transcendentals=0,
        bytes_accessed=int(2 * 2 * n_pad * n_pad + n_pad * d_p * 2
                           + n_pad * (o_p + c_p) * 4),
    )

    f_pad, logits_pad = pl.pallas_call(
        gcn_kernel,
        out_shape=(
            jax.ShapeDtypeStruct((n_pad, o_p), jnp.float32),
            jax.ShapeDtypeStruct((n_pad, c_p), jnp.float32),
        ),
        grid_spec=gcn_grid,
        compiler_params=pltpu.CompilerParams(
            # pass / tile / k axes all carry dependencies through the H and accumulator scratches
            dimension_semantics=("arbitrary", "arbitrary", "arbitrary"),
            vmem_limit_bytes=vmem_limit,
        ),
        cost_estimate=gcn_cost,
    )(a_p, x_p, w1, b1, w2, b2, wc, bc)

    # ---------------- edge projector: separate pass, tiled over edge blocks ----------------
    te = _pick_tile(e_pad, 512)
    n_e_tiles = e_pad // te

    src_p = jnp.zeros((e_pad,), jnp.int32).at[:e].set(edge_index[0].astype(jnp.int32))
    dst_p = jnp.zeros((e_pad,), jnp.int32).at[:e].set(edge_index[1].astype(jnp.int32))

    we1s = _pad2(params["we1"][:out_dim, :], o_p, p_p, jnp.bfloat16)   # multiplies f_src
    we1d = _pad2(params["we1"][out_dim:, :], o_p, p_p, jnp.bfloat16)   # multiplies f_dst
    be1 = _pad2(params["be1"], 1, p_p, jnp.float32)
    we2 = _pad2(params["we2"], p_p, o_p, jnp.bfloat16)
    be2 = _pad2(params["be2"], 1, o_p, jnp.float32)

    res_e = lambda t, s, d: (0, 0)
    edge_grid = pltpu.PrefetchScalarGridSpec(
        num_scalar_prefetch=2,                         # src / dst ids land in SMEM
        grid=(n_e_tiles,),
        in_specs=[
            pl.BlockSpec((n_pad, o_p), res_e),         # F (resident, f32 -> clean row gathers)
            pl.BlockSpec((o_p, p_p), res_e),           # We1 src half
            pl.BlockSpec((o_p, p_p), res_e),           # We1 dst half
            pl.BlockSpec((1, p_p), res_e),             # be1
            pl.BlockSpec((p_p, o_p), res_e),           # We2
            pl.BlockSpec((1, o_p), res_e),             # be2
        ],
        out_specs=pl.BlockSpec((te, o_p), lambda t, s, d: (t, 0)),
        scratch_shapes=[
            pltpu.VMEM((te, o_p), jnp.float32),        # gathered F[src]
            pltpu.VMEM((te, o_p), jnp.float32),        # gathered F[dst]
        ],
    )

    edge_cost = pl.CostEstimate(
        flops=int(2 * e_pad * (2 * o_p * p_p + p_p * o_p)),
        transcendentals=0,
        bytes_accessed=int(n_pad * o_p * 4 + e_pad * o_p * 4 + e_pad * 8),
    )

    edge_pad = pl.pallas_call(
        edge_mlp_kernel,
        out_shape=jax.ShapeDtypeStruct((e_pad, o_p), jnp.float32),
        grid_spec=edge_grid,
        compiler_params=pltpu.CompilerParams(
            dimension_semantics=("parallel",),         # edge tiles are independent
            vmem_limit_bytes=vmem_limit,
        ),
        cost_estimate=edge_cost,
    )(src_p, dst_p, f_pad, we1s, we1d, be1, we2, be2)

    f = f_pad[:n, :out_dim]
    logits = logits_pad[:n, :ncls]
    edge_feats = edge_pad[:e, :out_dim]
    return f, edge_feats, logits, edge_index


# ----------------------------- reference (precision-matched) ----------------------------

def reference_forward(params, x, edge_index):
    """Pure-JAX reference with the same bf16-operand / f32-accumulate matmul precision."""
    bf = jnp.bfloat16
    dot = functools.partial(jnp.dot, preferred_element_type=jnp.float32)
    a = build_norm_adj(edge_index, x.shape[0]).astype(bf)
    agg1 = dot(a, x.astype(bf))
    h = jnp.maximum(dot(agg1.astype(bf), params["w1"].astype(bf)) + params["b1"], 0.0)
    agg2 = dot(a, h.astype(bf))
    f = dot(agg2.astype(bf), params["w2"].astype(bf)) + params["b2"]
    logits = dot(f.astype(bf), params["wc"].astype(bf)) + params["bc"]
    row, col = edge_index
    out_dim = params["w2"].shape[1]
    we1s = params["we1"][:out_dim].astype(bf)
    we1d = params["we1"][out_dim:].astype(bf)
    he = jnp.maximum(dot(f[row].astype(bf), we1s) + dot(f[col].astype(bf), we1d)
                     + params["be1"], 0.0)
    edge_feats = dot(he.astype(bf), params["we2"].astype(bf)) + params["be2"]
    return f, edge_feats, logits


# ----------------------------- parameter init -------------------------------------------

def xavier_normal(key, fan_in, fan_out):
    std = (2.0 / (fan_in + fan_out)) ** 0.5
    # stored as [in, out] so forward is x @ W (PyTorch Linear stores [out, in] and does x @ W.T)
    return std * jax.random.normal(key, (fan_in, fan_out), dtype=jnp.float32)


def init_params(key, input_dim, hidden_dim, output_dim, edge_proj_hidden, num_classes):
    ks = jax.random.split(key, 5)
    return {
        "w1": xavier_normal(ks[0], input_dim, hidden_dim),
        "b1": jnp.zeros((1, hidden_dim), jnp.float32),
        "w2": xavier_normal(ks[1], hidden_dim, output_dim),
        "b2": jnp.zeros((1, output_dim), jnp.float32),
        "we1": xavier_normal(ks[2], 2 * output_dim, edge_proj_hidden),
        "be1": jnp.zeros((1, edge_proj_hidden), jnp.float32),
        "we2": xavier_normal(ks[3], edge_proj_hidden, output_dim),
        "be2": jnp.zeros((1, output_dim), jnp.float32),
        "wc": xavier_normal(ks[4], output_dim, num_classes),
        "bc": jnp.zeros((1, num_classes), jnp.float32),
    }


# ----------------------------- main -------------------------------------------------------

if __name__ == "__main__":
    N = 16            # nodes
    E = 32            # edges
    INPUT_DIM = 8
    HIDDEN_DIM = 32
    OUTPUT_DIM = 16
    EDGE_PROJ_HIDDEN = 32
    NUM_CLASSES = 4

    key = jax.random.PRNGKey(0)
    k_param, k_x, k_row, k_col = jax.random.split(key, 4)

    params = init_params(k_param, INPUT_DIM, HIDDEN_DIM, OUTPUT_DIM,
                         EDGE_PROJ_HIDDEN, NUM_CLASSES)

    x = jax.random.normal(k_x, (N, INPUT_DIM), dtype=jnp.float32)
    row = jax.random.randint(k_row, (E,), 0, N, dtype=jnp.int32)
    col = jax.random.randint(k_col, (E,), 0, N, dtype=jnp.int32)
    edge_index = jnp.stack([row, col], axis=0)   # [2, E] int32

    f, edge_feats, logits, ei = graph_encoder_forward(params, x, edge_index)
    jax.block_until_ready((f, edge_feats, logits, ei))

    assert f.shape == (N, OUTPUT_DIM)
    assert edge_feats.shape == (E, OUTPUT_DIM)
    assert logits.shape == (N, NUM_CLASSES)
    assert ei.shape == (2, E)

    # sanity check against a precision-matched pure-JAX reference
    f_ref, ef_ref, lg_ref = reference_forward(params, x, edge_index)
    for name, got, want in (("f", f, f_ref), ("edge_feats", edge_feats, ef_ref),
                            ("logits", logits, lg_ref)):
        err = float(jnp.max(jnp.abs(got - want)))
        assert err < 5e-2, f"{name} max|err|={err}"

    print("KERNEL_OK")
</pallas_src>

<mosaic_0001>
module attributes {stable_mosaic.version = 11 : i64} {
  func.func @gcn_kernel(%arg0: i32, %arg1: i32, %arg2: i32, %arg3: memref<128x128xbf16, #tpu.memory_space<vmem>>, %arg4: memref<128x128xbf16, #tpu.memory_space<vmem>>, %arg5: memref<128x128xbf16, #tpu.memory_space<vmem>>, %arg6: memref<1x128xf32, #tpu.memory_space<vmem>>, %arg7: memref<128x128xbf16, #tpu.memory_space<vmem>>, %arg8: memref<1x128xf32, #tpu.memory_space<vmem>>, %arg9: memref<128x128xbf16, #tpu.memory_space<vmem>>, %arg10: memref<1x128xf32, #tpu.memory_space<vmem>>, %arg11: memref<128x128xf32, #tpu.memory_space<vmem>>, %arg12: memref<128x128xf32, #tpu.memory_space<vmem>>, %arg13: memref<128x128xbf16, #tpu.memory_space<vmem>>, %arg14: memref<128x128xf32, #tpu.memory_space<vmem>>, %arg15: memref<128x128xf32, #tpu.memory_space<vmem>>) attributes {dimension_semantics = [#tpu.dimension_semantics<arbitrary>, #tpu.dimension_semantics<arbitrary>, #tpu.dimension_semantics<arbitrary>], iteration_bounds = array<i64: 2, 1, 1>, scalar_prefetch = 0 : i64, scratch_operands = 3 : i64, tpu.core_type = #tpu.core_type<tc>, window_params = [{transform_indices = @transform_0, window_bounds = array<i64: 128, 128>}, {transform_indices = @transform_1, window_bounds = array<i64: 128, 128>}, {pipeline_mode = #tpu.pipeline_mode<synchronous>, transform_indices = @transform_2, window_bounds = array<i64: 128, 128>}, {pipeline_mode = #tpu.pipeline_mode<synchronous>, transform_indices = @transform_3, window_bounds = array<i64: 1, 128>}, {pipeline_mode = #tpu.pipeline_mode<synchronous>, transform_indices = @transform_4, window_bounds = array<i64: 128, 128>}, {pipeline_mode = #tpu.pipeline_mode<synchronous>, transform_indices = @transform_5, window_bounds = array<i64: 1, 128>}, {pipeline_mode = #tpu.pipeline_mode<synchronous>, transform_indices = @transform_6, window_bounds = array<i64: 128, 128>}, {pipeline_mode = #tpu.pipeline_mode<synchronous>, transform_indices = @transform_7, window_bounds = array<i64: 1, 128>}, {transform_indices = @transform_8, window_bounds = array<i64: 128, 128>}, {transform_indices = @transform_9, window_bounds = array<i64: 128, 128>}]} {
    %c128_i32 = arith.constant 128 : i32
    %0 = arith.muli %arg1, %c128_i32 : i32
    %1 = tpu.assume_multiple %0, 128 : i32
    %c128_i32_0 = arith.constant 128 : i32
    %2 = arith.muli %arg2, %c128_i32_0 : i32
    %3 = tpu.assume_multiple %2, 128 : i32
    %c0 = arith.constant 0 : index
    %c0_1 = arith.constant 0 : index
    %4 = vector.load %arg3[%c0, %c0_1] : memref<128x128xbf16, #tpu.memory_space<vmem>>, vector<128x128xbf16>
    %c0_i32 = arith.constant 0 : i32
    %5 = arith.cmpi eq, %arg0, %c0_i32 : i32
    %6 = arith.extui %5 : i1 to i32
    %c0_i32_2 = arith.constant 0 : i32
    %7 = arith.cmpi ne, %6, %c0_i32_2 : i32
    scf.if %7 {
      %c0_i32_4 = arith.constant 0 : i32
      %11 = arith.cmpi eq, %arg2, %c0_i32_4 : i32
      %12 = arith.extui %11 : i1 to i32
      %c0_i32_5 = arith.constant 0 : i32
      %13 = arith.cmpi ne, %12, %c0_i32_5 : i32
      scf.if %13 {
        %cst_14 = arith.constant 0.000000e+00 : f32
        %22 = vector.broadcast %cst_14 : f32 to vector<128x128xf32>
        %c0_15 = arith.constant 0 : index
        %c0_16 = arith.constant 0 : index
        %23 = vector.load %arg14[%c0_15, %c0_16] : memref<128x128xf32, #tpu.memory_space<vmem>>, vector<128x128xf32>
        tpu.vector_store %arg14[%c0_15, %c0_16], %22 {strides = array<i32>} : memref<128x128xf32, #tpu.memory_space<vmem>>, vector<128x128xf32>,
      } else {
      }
      %c0_6 = arith.constant 0 : index
      %c0_7 = arith.constant 0 : index
      %14 = vector.load %arg14[%c0_6, %c0_7] : memref<128x128xf32, #tpu.memory_space<vmem>>, vector<128x128xf32>
      %c0_8 = arith.constant 0 : index
      %c0_9 = arith.constant 0 : index
      %15 = vector.load %arg4[%c0_8, %c0_9] : memref<128x128xbf16, #tpu.memory_space<vmem>>, vector<128x128xbf16>
      %cst = arith.constant dense<0.000000e+00> : vector<128x128xf32>
      %16 = tpu.matmul %4, %15, %cst {dimension_numbers = #tpu.dot_dimension_numbers<[1], [0], [0], [1], [0, 0, 1, 1], [], []>} : vector<128x128xbf16>, vector<128x128xbf16>, vector<128x128xf32> -> vector<128x128xf32>
      %17 = arith.addf %14, %16 : vector<128x128xf32>
      %c0_10 = arith.constant 0 : index
      %c0_11 = arith.constant 0 : index
      %18 = vector.load %arg14[%c0_10, %c0_11] : memref<128x128xf32, #tpu.memory_space<vmem>>, vector<128x128xf32>
      tpu.vector_store %arg14[%c0_10, %c0_11], %17 {strides = array<i32>} : memref<128x128xf32, #tpu.memory_space<vmem>>, vector<128x128xf32>,
      %c0_i32_12 = arith.constant 0 : i32
      %19 = arith.cmpi eq, %arg2, %c0_i32_12 : i32
      %20 = arith.extui %19 : i1 to i32
      %c0_i32_13 = arith.constant 0 : i32
      %21 = arith.cmpi ne, %20, %c0_i32_13 : i32
      scf.if %21 {
        %c0_14 = arith.constant 0 : index
        %c0_15 = arith.constant 0 : index
        %22 = vector.load %arg14[%c0_14, %c0_15] : memref<128x128xf32, #tpu.memory_space<vmem>>, vector<128x128xf32>
        %23 = arith.truncf %22 : vector<128x128xf32> to vector<128x128xbf16>
        %c0_16 = arith.constant 0 : index
        %c0_17 = arith.constant 0 : index
        %24 = vector.load %arg5[%c0_16, %c0_17] : memref<128x128xbf16, #tpu.memory_space<vmem>>, vector<128x128xbf16>
        %cst_18 = arith.constant dense<0.000000e+00> : vector<128x128xf32>
        %25 = tpu.matmul %23, %24, %cst_18 {dimension_numbers = #tpu.dot_dimension_numbers<[1], [0], [0], [1], [0, 0, 1, 1], [], []>} : vector<128x128xbf16>, vector<128x128xbf16>, vector<128x128xf32> -> vector<128x128xf32>
        %c0_19 = arith.constant 0 : index
        %c0_20 = arith.constant 0 : index
        %26 = vector.load %arg6[%c0_19, %c0_20] : memref<1x128xf32, #tpu.memory_space<vmem>>, vector<1x128xf32>
        %27 = vector.broadcast %26 : vector<1x128xf32> to vector<128x128xf32>
        %28 = arith.addf %25, %27 : vector<128x128xf32>
        %cst_21 = arith.constant 0.000000e+00 : f32
        %29 = vector.broadcast %cst_21 : f32 to vector<128x128xf32>
        %30 = arith.maximumf %28, %29 : vector<128x128xf32>
        %31 = arith.truncf %30 : vector<128x128xf32> to vector<128x128xbf16>
        %32 = arith.index_cast %1 : i32 to index
        %c0_22 = arith.constant 0 : index
        %33 = vector.load %arg13[%32, %c0_22] : memref<128x128xbf16, #tpu.memory_space<vmem>>, vector<128x128xbf16>
        tpu.vector_store %arg13[%32, %c0_22], %31 {strides = array<i32>} : memref<128x128xbf16, #tpu.memory_space<vmem>>, vector<128x128xbf16>,
      } else {
      }
    } else {
    }
    %c1_i32 = arith.constant 1 : i32
    %8 = arith.cmpi eq, %arg0, %c1_i32 : i32
    %9 = arith.extui %8 : i1 to i32
    %c0_i32_3 = arith.constant 0 : i32
    %10 = arith.cmpi ne, %9, %c0_i32_3 : i32
    scf.if %10 {
      %c0_i32_4 = arith.constant 0 : i32
      %11 = arith.cmpi eq, %arg2, %c0_i32_4 : i32
      %12 = arith.extui %11 : i1 to i32
      %c0_i32_5 = arith.constant 0 : i32
      %13 = arith.cmpi ne, %12, %c0_i32_5 : i32
      scf.if %13 {
        %cst_13 = arith.constant 0.000000e+00 : f32
        %23 = vector.broadcast %cst_13 : f32 to vector<128x128xf32>
        %c0_14 = arith.constant 0 : index
        %c0_15 = arith.constant 0 : index
        %24 = vector.load %arg15[%c0_14, %c0_15] : memref<128x128xf32, #tpu.memory_space<vmem>>, vector<128x128xf32>
        tpu.vector_store %arg15[%c0_14, %c0_15], %23 {strides = array<i32>} : memref<128x128xf32, #tpu.memory_space<vmem>>, vector<128x128xf32>,
      } else {
      }
      %c0_6 = arith.constant 0 : index
      %c0_7 = arith.constant 0 : index
      %14 = vector.load %arg15[%c0_6, %c0_7] : memref<128x128xf32, #tpu.memory_space<vmem>>, vector<128x128xf32>
      %15 = arith.index_cast %3 : i32 to index
      %c0_8 = arith.constant 0 : index
      %16 = vector.load %arg13[%15, %c0_8] : memref<128x128xbf16, #tpu.memory_space<vmem>>, vector<128x128xbf16>
      %cst = arith.constant dense<0.000000e+00> : vector<128x128xf32>
      %17 = tpu.matmul %4, %16, %cst {dimension_numbers = #tpu.dot_dimension_numbers<[1], [0], [0], [1], [0, 0, 1, 1], [], []>} : vector<128x128xbf16>, vector<128x128xbf16>, vector<128x128xf32> -> vector<128x128xf32>
      %18 = arith.addf %14, %17 : vector<128x128xf32>
      %c0_9 = arith.constant 0 : index
      %c0_10 = arith.constant 0 : index
      %19 = vector.load %arg15[%c0_9, %c0_10] : memref<128x128xf32, #tpu.memory_space<vmem>>, vector<128x128xf32>
      tpu.vector_store %arg15[%c0_9, %c0_10], %18 {strides = array<i32>} : memref<128x128xf32, #tpu.memory_space<vmem>>, vector<128x128xf32>,
      %c0_i32_11 = arith.constant 0 : i32
      %20 = arith.cmpi eq, %arg2, %c0_i32_11 : i32
      %21 = arith.extui %20 : i1 to i32
      %c0_i32_12 = arith.constant 0 : i32
      %22 = arith.cmpi ne, %21, %c0_i32_12 : i32
      scf.if %22 {
        %c0_13 = arith.constant 0 : index
        %c0_14 = arith.constant 0 : index
        %23 = vector.load %arg15[%c0_13, %c0_14] : memref<128x128xf32, #tpu.memory_space<vmem>>, vector<128x128xf32>
        %24 = arith.truncf %23 : vector<128x128xf32> to vector<128x128xbf16>
        %c0_15 = arith.constant 0 : index
        %c0_16 = arith.constant 0 : index
        %25 = vector.load %arg7[%c0_15, %c0_16] : memref<128x128xbf16, #tpu.memory_space<vmem>>, vector<128x128xbf16>
        %cst_17 = arith.constant dense<0.000000e+00> : vector<128x128xf32>
        %26 = tpu.matmul %24, %25, %cst_17 {dimension_numbers = #tpu.dot_dimension_numbers<[1], [0], [0], [1], [0, 0, 1, 1], [], []>} : vector<128x128xbf16>, vector<128x128xbf16>, vector<128x128xf32> -> vector<128x128xf32>
        %c0_18 = arith.constant 0 : index
        %c0_19 = arith.constant 0 : index
        %27 = vector.load %arg8[%c0_18, %c0_19] : memref<1x128xf32, #tpu.memory_space<vmem>>, vector<1x128xf32>
        %28 = vector.broadcast %27 : vector<1x128xf32> to vector<128x128xf32>
        %29 = arith.addf %26, %28 : vector<128x128xf32>
        %c0_20 = arith.constant 0 : index
        %c0_21 = arith.constant 0 : index
        %30 = vector.load %arg11[%c0_20, %c0_21] : memref<128x128xf32, #tpu.memory_space<vmem>>, vector<128x128xf32>
        tpu.vector_store %arg11[%c0_20, %c0_21], %29 {strides = array<i32>} : memref<128x128xf32, #tpu.memory_space<vmem>>, vector<128x128xf32>,
        %31 = arith.truncf %29 : vector<128x128xf32> to vector<128x128xbf16>
        %c0_22 = arith.constant 0 : index
        %c0_23 = arith.constant 0 : index
        %32 = vector.load %arg9[%c0_22, %c0_23] : memref<128x128xbf16, #tpu.memory_space<vmem>>, vector<128x128xbf16>
        %cst_24 = arith.constant dense<0.000000e+00> : vector<128x128xf32>
        %33 = tpu.matmul %31, %32, %cst_24 {dimension_numbers = #tpu.dot_dimension_numbers<[1], [0], [0], [1], [0, 0, 1, 1], [], []>} : vector<128x128xbf16>, vector<128x128xbf16>, vector<128x128xf32> -> vector<128x128xf32>
        %c0_25 = arith.constant 0 : index
        %c0_26 = arith.constant 0 : index
        %34 = vector.load %arg10[%c0_25, %c0_26] : memref<1x128xf32, #tpu.memory_space<vmem>>, vector<1x128xf32>
        %35 = vector.broadcast %34 : vector<1x128xf32> to vector<128x128xf32>
        %36 = arith.addf %33, %35 : vector<128x128xf32>
        %c0_27 = arith.constant 0 : index
        %c0_28 = arith.constant 0 : index
        %37 = vector.load %arg12[%c0_27, %c0_28] : memref<128x128xf32, #tpu.memory_space<vmem>>, vector<128x128xf32>
        tpu.vector_store %arg12[%c0_27, %c0_28], %36 {strides = array<i32>} : memref<128x128xf32, #tpu.memory_space<vmem>>, vector<128x128xf32>,
      } else {
      }
    } else {
    }
    return
  }
  func.func @transform_0(%arg0: i32, %arg1: i32, %arg2: i32) -> (i32, i32) {
    %c0_i32 = arith.constant 0 : i32
    return %arg1, %arg2 : i32, i32
  }
  func.func @transform_1(%arg0: i32, %arg1: i32, %arg2: i32) -> (i32, i32) {
    %c1_i32 = arith.constant 1 : i32
    %0 = arith.subi %c1_i32, %arg0 : i32
    %1 = arith.muli %arg2, %0 : i32
    %c0_i32 = arith.constant 0 : i32
    %c0_i32_0 = arith.constant 0 : i32
    return %1, %c0_i32 : i32, i32
  }
  func.func @transform_2(%arg0: i32, %arg1: i32, %arg2: i32) -> (i32, i32) {
    %c0_i32 = arith.constant 0 : i32
    %c0_i32_0 = arith.constant 0 : i32
    %c0_i32_1 = arith.constant 0 : i32
    return %c0_i32, %c0_i32_0 : i32, i32
  }
  func.func @transform_3(%arg0: i32, %arg1: i32, %arg2: i32) -> (i32, i32) {
    %c0_i32 = arith.constant 0 : i32
    %c0_i32_0 = arith.constant 0 : i32
    %c0_i32_1 = arith.constant 0 : i32
    return %c0_i32, %c0_i32_0 : i32, i32
  }
  func.func @transform_4(%arg0: i32, %arg1: i32, %arg2: i32) -> (i32, i32) {
    %c0_i32 = arith.constant 0 : i32
    %c0_i32_0 = arith.constant 0 : i32
    %c0_i32_1 = arith.constant 0 : i32
    return %c0_i32, %c0_i32_0 : i32, i32
  }
  func.func @transform_5(%arg0: i32, %arg1: i32, %arg2: i32) -> (i32, i32) {
    %c0_i32 = arith.constant 0 : i32
    %c0_i32_0 = arith.constant 0 : i32
    %c0_i32_1 = arith.constant 0 : i32
    return %c0_i32, %c0_i32_0 : i32, i32
  }
  func.func @transform_6(%arg0: i32, %arg1: i32, %arg2: i32) -> (i32, i32) {
    %c0_i32 = arith.constant 0 : i32
    %c0_i32_0 = arith.constant 0 : i32
    %c0_i32_1 = arith.constant 0 : i32
    return %c0_i32, %c0_i32_0 : i32, i32
  }
  func.func @transform_7(%arg0: i32, %arg1: i32, %arg2: i32) -> (i32, i32) {
    %c0_i32 = arith.constant 0 : i32
    %c0_i32_0 = arith.constant 0 : i32
    %c0_i32_1 = arith.constant 0 : i32
    return %c0_i32, %c0_i32_0 : i32, i32
  }
  func.func @transform_8(%arg0: i32, %arg1: i32, %arg2: i32) -> (i32, i32) {
    %0 = arith.muli %arg1, %arg0 : i32
    %c0_i32 = arith.constant 0 : i32
    %c0_i32_0 = arith.constant 0 : i32
    return %0, %c0_i32 : i32, i32
  }
  func.func @transform_9(%arg0: i32, %arg1: i32, %arg2: i32) -> (i32, i32) {
    %0 = arith.muli %arg1, %arg0 : i32
    %c0_i32 = arith.constant 0 : i32
    %c0_i32_0 = arith.constant 0 : i32
    return %0, %c0_i32 : i32, i32
  }
}

</mosaic_0001>

<llo_original>
// kernel: tpu_custom_call.1
$region0: #{tpu_custom_call.1}
  #allocation0 [shape = 'u32[]', space=smem, size = 0x4, offset = 0x4, fixed_abs, tag = 'smem constant byte address 0x4 - core index']
  #allocation1 [shape = 'u32[144,128]{1,0:T(1,128)}', space=vmem, size = 0x12000, scoped, tag = 'internal scratch']
  #allocation2 [shape = 'bf16[128,128]{1,0:T(16,128)(2,1)}', space=vmem, size = 0x8000, scoped, tag = 'scratch operand']
  #allocation3 [shape = 'f32[128,128]{1,0:T(8,128)}', space=vmem, size = 0x10000, scoped, tag = 'scratch operand']
  #allocation4 [shape = 'f32[128,128]{1,0:T(8,128)}', space=vmem, size = 0x10000, scoped, tag = 'scratch operand']
  %s0 = inlined_call_operand.hbm [shape: bf16[128,128], index: 0, kind: input, shape index: {}]
  %s1 = inlined_call_operand.hbm [shape: bf16[128,128], index: 1, kind: input, shape index: {}]
  %s2 = inlined_call_operand.hbm [shape: bf16[128,128], index: 2, kind: input, shape index: {}]
  %s3 = inlined_call_operand.vmem [shape: f32[1,128], index: 3, kind: input, shape index: {}]
  %s4 = inlined_call_operand.hbm [shape: bf16[128,128], index: 4, kind: input, shape index: {}]
  %s5 = inlined_call_operand.vmem [shape: f32[1,128], index: 5, kind: input, shape index: {}]
  %s6 = inlined_call_operand.hbm [shape: bf16[128,128], index: 6, kind: input, shape index: {}]
  %s7 = inlined_call_operand.vmem [shape: f32[1,128], index: 7, kind: input, shape index: {}]
  %s8 = inlined_call_operand.hbm [shape: f32[128,128], index: 8, kind: output, shape index: {0}]
  %s9 = inlined_call_operand.hbm [shape: f32[128,128], index: 9, kind: output, shape index: {1}]
  %10 = xla_tuple %s8, %s9
  %s11 = sld [smem:[#allocation0]]
  $region117: #{tpu_custom_call.1} parent=0
    _
  %s13 = ssub.s32 1, %s11
  %s14 = scalar_select 0, %s13, %s11
  $region1: #{tpu_custom_call.1} parent=0
    #allocation5 [shape = 'u8[32768]{0}', space=vmem, size = 0x8000, scoped, tag = 'input window, operand 0, single buffered']
    #allocation6 [shape = 's32[2]{0}', space=sflag, size = 0x8, scoped, tag = 'scoped memory for tpu_custom_call.1']
    #allocation7 [shape = 's32[2]{0}', space=sflag, size = 0x8, scoped, tag = 'scoped memory for tpu_custom_call.1']
    #allocation8 [shape = 'u8[65536]{0}', space=vmem, size = 0x10000, scoped, tag = 'input window, operand 1']
    #allocation9 [shape = 's32[2]{0}', space=sflag, size = 0x8, scoped, tag = 'scoped memory for tpu_custom_call.1']
    #allocation10 [shape = 'u8[32768]{0}', space=vmem, size = 0x8000, scoped, tag = 'input window, operand 2, single buffered']
    #allocation11 [shape = 'u8[32768]{0}', space=vmem, size = 0x8000, scoped, tag = 'input window, operand 4, single buffered']
    #allocation12 [shape = 's32[1]{0}', space=sflag, size = 0x4, scoped, tag = 'scoped memory for tpu_custom_call.1']
    #allocation13 [shape = 'u8[32768]{0}', space=vmem, size = 0x8000, scoped, tag = 'input window, operand 6, single buffered']
    #allocation14 [shape = 'u8[131072]{0}', space=vmem, size = 0x20000, scoped, tag = 'output window, operand 0']
    #allocation15 [shape = 'u8[131072]{0}', space=vmem, size = 0x20000, scoped, tag = 'output window, operand 1']
    #allocation16 [shape = 's32[2]{0}', space=sflag, size = 0x8, scoped, tag = 'scoped memory for tpu_custom_call.1']
    %15 = vsyncpa [#allocation6], 0
    %16 = vsyncpa [#allocation9], 0
    %s17 = scalar_lea.sflag [#allocation9], 1
    %18 = vsyncpa %s17, 0
    %19 = vsyncpa [#allocation12], 0
    %20 = vsyncpa [#allocation7], 0
    %s21 = scalar_lea.sflag [#allocation7], 1
    %22 = vsyncpa %s21, 0
    %23 = vsyncpa [#allocation16], 0
    %s24 = scalar_lea.sflag [#allocation16], 1
    %25 = vsyncpa %s24, 0
    loop: start=0, step=1, limit=4
    $region2: #{tpu_custom_call.1} parent=1 // loop_pre_header
      _
    $region3: #{tpu_custom_call.1} parent=1 // loop_header
      %s27 = sphi 0, %s31
      %p28 = scmp.ge.s32.totalorder %s27, 4
      %s34 = sphi 0, %s53
      %s35 = sphi 0, %s49
      %s36 = sphi 0, %s45
      %s37 = sphi 0, %s34
      %s38 = sphi 0, %s35
      %s39 = sphi 0, %s36
      %s40 = sphi 0, %s37
      %s41 = sphi 0, %s38
      %s42 = sphi 0, %s39
      %s58 = sphi 0, %s60
      %s61 = sphi 0, %s58
      %s62 = sphi 0, %s61
      %s78 = sphi 0, %s62
      %s88 = sphi 0, %s90
      %s91 = sphi 0, %s88
      %s92 = sphi 0, %s91
      %s108 = sphi 0, %s92
      %s112 = sphi 0, %s112
      %s114 = sphi 0, %s112
      %s115 = sphi 0, %s114
      %s129 = sphi 0, %s115
      %s133 = sphi 0, %s133
      %s135 = sphi 0, %s133
      %s136 = sphi 0, %s135
      %s150 = sphi 0, %s136
      %s154 = sphi 0, %s154
      %s156 = sphi 0, %s154
      %s157 = sphi 0, %s156
      %s171 = sphi 0, %s157
      %s175 = sphi 0, %s175
      %s177 = sphi 0, %s175
      %s178 = sphi 0, %s177
      %s192 = sphi 0, %s178
      %s196 = sphi 0, %s196
      %s198 = sphi 0, %s196
      %s199 = sphi 0, %s198
      %s213 = sphi 0, %s199
      %s217 = sphi 0, %s217
      %s219 = sphi 0, %s217
      %s220 = sphi 0, %s219
      %s234 = sphi 0, %s220
      %s242 = sphi 0, %s244
      %s245 = sphi 0, %s242
      %s246 = sphi 0, %s245
      %s262 = sphi 0, %s246
      %s270 = sphi 0, %s272
      %s273 = sphi 0, %s270
      %s274 = sphi 0, %s273
      %s290 = sphi 0, %s274
    $region4: #{tpu_custom_call.1} parent=1 // loop_header_branch
      %30 = sbr.rel (%p28) target = $region8
    $region5: #{tpu_custom_call.1} parent=1 // loop_body
      %s32 = ssub.s32 %s27, 1
      %s33 = ssub.s32 %s27, 2
      %s43 = sadd.s32 1, %s36
      %p44 = scmp.ge.s32.totalorder %s43, 1
      %s45 = scalar_select %p44, 0, %s43
      %s46 = sadd.s32 1, %s35
      %s47 = scalar_select %p44, %s46, %s35
      %p48 = scmp.ge.s32.totalorder %s47, 1
      %s49 = scalar_select %p48, 0, %s47
      %s50 = sadd.s32 1, %s34
      %s51 = scalar_select %p48, %s50, %s34
      %p52 = scmp.ge.s32.totalorder %s51, 2
      %s53 = scalar_select %p52, 0, %s51
      %s54 = ssub.s32 %s35, %s49
      %s55 = ssub.s32 %s36, %s45
      %s56 = sor.u32 %s54, %s55
      %p57 = scmp.eq.s32.totalorder %s56, 0
      %s59 = sadd.s32 %s58, 1
      %s60 = scalar_select %p57, %s58, %s59
      %p63 = pneg %p57
      %p64 = scmp.eq.s32.totalorder %s27, 1
      %p65 = por %p63, %p64
      %p66 = scmp.ne.s32.totalorder %s58, %s61
      %p67 = scmp.eq.s32.totalorder %s27, 0
      %p68 = por %p66, %p67
      %p69 = scmp.ne.s32.totalorder %s58, %s61
      %p70 = scmp.eq.s32.totalorder %s32, 1
      %p71 = por %p69, %p70
      %p72 = scmp.ne.s32.totalorder %s61, %s62
      %p73 = scmp.eq.s32.totalorder %s32, 0
      %p74 = por %p72, %p73
      %p75 = scmp.ne.s32.totalorder %s61, %s62
      %p76 = scmp.eq.s32.totalorder %s33, 1
      %p77 = por %p75, %p76
      %p79 = scmp.ne.s32.totalorder %s62, %s78
      %p80 = scmp.eq.s32.totalorder %s33, 0
      %p81 = por %p79, %p80
      %s82 = ssub.s32 1, %s34
      %s83 = smul.u32 %s36, %s82
      %s84 = ssub.s32 1, %s53
      %s85 = smul.u32 %s45, %s84
      %s86 = ssub.s32 %s83, %s85
      %p87 = scmp.eq.s32.totalorder %s86, 0
      %s89 = sadd.s32 %s88, 1
      %s90 = scalar_select %p87, %s88, %s89
      %p93 = pneg %p87
      %p94 = scmp.eq.s32.totalorder %s27, 1
      %p95 = por %p93, %p94
      %p96 = scmp.ne.s32.totalorder %s88, %s91
      %p97 = scmp.eq.s32.totalorder %s27, 0
      %p98 = por %p96, %p97
      %p99 = scmp.ne.s32.totalorder %s88, %s91
      %p100 = scmp.eq.s32.totalorder %s32, 1
      %p101 = por %p99, %p100
      %p102 = scmp.ne.s32.totalorder %s91, %s92
      %p103 = scmp.eq.s32.totalorder %s32, 0
      %p104 = por %p102, %p103
      %p105 = scmp.ne.s32.totalorder %s91, %s92
      %p106 = scmp.eq.s32.totalorder %s33, 1
      %p107 = por %p105, %p106
      %p109 = scmp.ne.s32.totalorder %s92, %s108
      %p110 = scmp.eq.s32.totalorder %s33, 0
      %p111 = por %p109, %p110
      %s113 = sadd.s32 %s112, 1
      %p116 = scmp.eq.s32.totalorder %s27, 1
      %p117 = scmp.ne.s32.totalorder %s112, %s114
      %p118 = scmp.eq.s32.totalorder %s27, 0
      %p119 = por %p117, %p118
      %p120 = scmp.ne.s32.totalorder %s112, %s114
      %p121 = scmp.eq.s32.totalorder %s32, 1
      %p122 = por %p120, %p121
      %p123 = scmp.ne.s32.totalorder %s114, %s115
      %p124 = scmp.eq.s32.totalorder %s32, 0
      %p125 = por %p123, %p124
      %p126 = scmp.ne.s32.totalorder %s114, %s115
      %p127 = scmp.eq.s32.totalorder %s33, 1
      %p128 = por %p126, %p127
      %p130 = scmp.ne.s32.totalorder %s115, %s129
      %p131 = scmp.eq.s32.totalorder %s33, 0
      %p132 = por %p130, %p131
      %s134 = sadd.s32 %s133, 1
      %p137 = scmp.eq.s32.totalorder %s27, 1
      %p138 = scmp.ne.s32.totalorder %s133, %s135
      %p139 = scmp.eq.s32.totalorder %s27, 0
      %p140 = por %p138, %p139
      %p141 = scmp.ne.s32.totalorder %s133, %s135
      %p142 = scmp.eq.s32.totalorder %s32, 1
      %p143 = por %p141, %p142
      %p144 = scmp.ne.s32.totalorder %s135, %s136
      %p145 = scmp.eq.s32.totalorder %s32, 0
      %p146 = por %p144, %p145
      %p147 = scmp.ne.s32.totalorder %s135, %s136
      %p148 = scmp.eq.s32.totalorder %s33, 1
      %p149 = por %p147, %p148
      %p151 = scmp.ne.s32.totalorder %s136, %s150
      %p152 = scmp.eq.s32.totalorder %s33, 0
      %p153 = por %p151, %p152
      %s155 = sadd.s32 %s154, 1
      %p158 = scmp.eq.s32.totalorder %s27, 1
      %p159 = scmp.ne.s32.totalorder %s154, %s156
      %p160 = scmp.eq.s32.totalorder %s27, 0
      %p161 = por %p159, %p160
      %p162 = scmp.ne.s32.totalorder %s154, %s156
      %p163 = scmp.eq.s32.totalorder %s32, 1
      %p164 = por %p162, %p163
      %p165 = scmp.ne.s32.totalorder %s156, %s157
      %p166 = scmp.eq.s32.totalorder %s32, 0
      %p167 = por %p165, %p166
      %p168 = scmp.ne.s32.totalorder %s156, %s157
      %p169 = scmp.eq.s32.totalorder %s33, 1
      %p170 = por %p168, %p169
      %p172 = scmp.ne.s32.totalorder %s157, %s171
      %p173 = scmp.eq.s32.totalorder %s33, 0
      %p174 = por %p172, %p173
      %s176 = sadd.s32 %s175, 1
      %p179 = scmp.eq.s32.totalorder %s27, 1
      %p180 = scmp.ne.s32.totalorder %s175, %s177
      %p181 = scmp.eq.s32.totalorder %s27, 0
      %p182 = por %p180, %p181
      %p183 = scmp.ne.s32.totalorder %s175, %s177
      %p184 = scmp.eq.s32.totalorder %s32, 1
      %p185 = por %p183, %p184
      %p186 = scmp.ne.s32.totalorder %s177, %s178
      %p187 = scmp.eq.s32.totalorder %s32, 0
      %p188 = por %p186, %p187
      %p189 = scmp.ne.s32.totalorder %s177, %s178
      %p190 = scmp.eq.s32.totalorder %s33, 1
      %p191 = por %p189, %p190
      %p193 = scmp.ne.s32.totalorder %s178, %s192
      %p194 = scmp.eq.s32.totalorder %s33, 0
      %p195 = por %p193, %p194
      %s197 = sadd.s32 %s196, 1
      %p200 = scmp.eq.s32.totalorder %s27, 1
      %p201 = scmp.ne.s32.totalorder %s196, %s198
      %p202 = scmp.eq.s32.totalorder %s27, 0
      %p203 = por %p201, %p202
      %p204 = scmp.ne.s32.totalorder %s196, %s198
      %p205 = scmp.eq.s32.totalorder %s32, 1
      %p206 = por %p204, %p205
      %p207 = scmp.ne.s32.totalorder %s198, %s199
      %p208 = scmp.eq.s32.totalorder %s32, 0
      %p209 = por %p207, %p208
      %p210 = scmp.ne.s32.totalorder %s198, %s199
      %p211 = scmp.eq.s32.totalorder %s33, 1
      %p212 = por %p210, %p211
      %p214 = scmp.ne.s32.totalorder %s199, %s213
      %p215 = scmp.eq.s32.totalorder %s33, 0
      %p216 = por %p214, %p215
      %s218 = sadd.s32 %s217, 1
      %p221 = scmp.eq.s32.totalorder %s27, 1
      %p222 = scmp.ne.s32.totalorder %s217, %s219
      %p223 = scmp.eq.s32.totalorder %s27, 0
      %p224 = por %p222, %p223
      %p225 = scmp.ne.s32.totalorder %s217, %s219
      %p226 = scmp.eq.s32.totalorder %s32, 1
      %p227 = por %p225, %p226
      %p228 = scmp.ne.s32.totalorder %s219, %s220
      %p229 = scmp.eq.s32.totalorder %s32, 0
      %p230 = por %p228, %p229
      %p231 = scmp.ne.s32.totalorder %s219, %s220
      %p232 = scmp.eq.s32.totalorder %s33, 1
      %p233 = por %p231, %p232
      %p235 = scmp.ne.s32.totalorder %s220, %s234
      %p236 = scmp.eq.s32.totalorder %s33, 0
      %p237 = por %p235, %p236
      %s238 = smul.u32 %s35, %s34
      %s239 = smul.u32 %s49, %s53
      %s240 = ssub.s32 %s238, %s239
      %p241 = scmp.eq.s32.totalorder %s240, 0
      %s243 = sadd.s32 %s242, 1
      %s244 = scalar_select %p241, %s242, %s243
      %p247 = pneg %p241
      %p248 = scmp.eq.s32.totalorder %s27, 1
      %p249 = por %p247, %p248
      %p250 = scmp.ne.s32.totalorder %s242, %s245
      %p251 = scmp.eq.s32.totalorder %s27, 0
      %p252 = por %p250, %p251
      %p253 = scmp.ne.s32.totalorder %s242, %s245
      %p254 = scmp.eq.s32.totalorder %s32, 1
      %p255 = por %p253, %p254
      %p256 = scmp.ne.s32.totalorder %s245, %s246
      %p257 = scmp.eq.s32.totalorder %s32, 0
      %p258 = por %p256, %p257
      %p259 = scmp.ne.s32.totalorder %s245, %s246
      %p260 = scmp.eq.s32.totalorder %s33, 1
      %p261 = por %p259, %p260
      %p263 = scmp.ne.s32.totalorder %s246, %s262
      %p264 = scmp.eq.s32.totalorder %s33, 0
      %p265 = por %p263, %p264
      %s266 = smul.u32 %s35, %s34
      %s267 = smul.u32 %s49, %s53
      %s268 = ssub.s32 %s266, %s267
      %p269 = scmp.eq.s32.totalorder %s268, 0
      %s271 = sadd.s32 %s270, 1
      %s272 = scalar_select %p269, %s270, %s271
      %p275 = pneg %p269
      %p276 = scmp.eq.s32.totalorder %s27, 1
      %p277 = por %p275, %p276
      %p278 = scmp.ne.s32.totalorder %s270, %s273
      %p279 = scmp.eq.s32.totalorder %s27, 0
      %p280 = por %p278, %p279
      %p281 = scmp.ne.s32.totalorder %s270, %s273
      %p282 = scmp.eq.s32.totalorder %s32, 1
      %p283 = por %p281, %p282
      %p284 = scmp.ne.s32.totalorder %s273, %s274
      %p285 = scmp.eq.s32.totalorder %s32, 0
      %p286 = por %p284, %p285
      %p287 = scmp.ne.s32.totalorder %s273, %s274
      %p288 = scmp.eq.s32.totalorder %s33, 1
      %p289 = por %p287, %p288
      %p291 = scmp.ne.s32.totalorder %s274, %s290
      %p292 = scmp.eq.s32.totalorder %s33, 0
      %p293 = por %p291, %p292
      %p294 = scmp.le.s32.totalorder 1, %s27
      %p295 = scmp.lt.s32.totalorder %s27, 3
      %p296 = pnand %p294, %p295
      %p297 = pneg %p296
      // Predicated region
      $region9: #{tpu_custom_call.1} parent=5 // pred_check
        _
      $region10: #{tpu_custom_call.1} parent=5 // pred_check_branch
        %299 = sbr.rel (%p296) target = $region12
      $region11: #{tpu_custom_call.1} parent=5 // pred_region
        %s300 = ssub.s32 %s27, 1
        // Predicated region
        $region13: #{tpu_custom_call.1} parent=11 // pred_check
          %p301 = pneg %p74
        $region14: #{tpu_custom_call.1} parent=11 // pred_check_branch
          %303 = sbr.rel (%p301) target = $region16
        $region15: #{tpu_custom_call.1} parent=11 // pred_region
          %s304 = smul.u32 16, %s38
          %s306 = ssub.s32 1024, 1024
          %307 = vsyncadd [#allocation6], %s306
          %s308 = sadd.s32 %s39, %s304
          %s309 = smul.addr %s308, 64
          %s310 = scalar_lea.hbm %s0, %s309
          %s311 = sshll.u32 [#allocation5], 4
          %s312 = int_to_ptr.vmem [resolvable:$true] %s311
          %317 = dma.hbm_to_vmem [thread:$0]  %s310, 1024, %s312, [#allocation6], 64, 64, 4
        $region16: #{tpu_custom_call.1} parent=11 // pred_fallthru
          _
        // Predicated region
        $region17: #{tpu_custom_call.1} parent=11 // pred_check
          %p318 = pneg %p125
        $region18: #{tpu_custom_call.1} parent=11 // pred_check_branch
          %320 = sbr.rel (%p318) target = $region20
        $region19: #{tpu_custom_call.1} parent=11 // pred_region
          %s322 = ssub.s32 1024, 1024
          %323 = vsyncadd [#allocation9], %s322
          %s324 = sshll.u32 [#allocation10], 4
          %s325 = int_to_ptr.vmem [resolvable:$true] %s324
          %330 = dma.hbm_to_vmem [thread:$0]  %s2, 1024, %s325, [#allocation9], 64, 64, 4
        $region20: #{tpu_custom_call.1} parent=11 // pred_fallthru
          _
        // Predicated region
        $region21: #{tpu_custom_call.1} parent=11 // pred_check
          %p331 = pneg %p146
        $region22: #{tpu_custom_call.1} parent=11 // pred_check_branch
          %333 = sbr.rel (%p331) target = $region24
        $region23: #{tpu_custom_call.1} parent=11 // pred_region
          _
        $region24: #{tpu_custom_call.1} parent=11 // pred_fallthru
          _
        // Predicated region
        $region25: #{tpu_custom_call.1} parent=11 // pred_check
          %p334 = pneg %p167
        $region26: #{tpu_custom_call.1} parent=11 // pred_check_branch
          %336 = sbr.rel (%p334) target = $region28
        $region27: #{tpu_custom_call.1} parent=11 // pred_region
          %s338 = ssub.s32 1024, 1024
          %339 = vsyncadd [#allocation12], %s338
          %s340 = sshll.u32 [#allocation11], 4
          %s341 = int_to_ptr.vmem [resolvable:$true] %s340
          %346 = dma.hbm_to_vmem [thread:$0]  %s4, 1024, %s341, [#allocation12], 64, 64, 4
        $region28: #{tpu_custom_call.1} parent=11 // pred_fallthru
          _
        // Predicated region
        $region29: #{tpu_custom_call.1} parent=11 // pred_check
          %p347 = pneg %p188
        $region30: #{tpu_custom_call.1} parent=11 // pred_check_branch
          %349 = sbr.rel (%p347) target = $region32
        $region31: #{tpu_custom_call.1} parent=11 // pred_region
          _
        $region32: #{tpu_custom_call.1} parent=11 // pred_fallthru
          _
        // Predicated region
        $region33: #{tpu_custom_call.1} parent=11 // pred_check
          %p350 = pneg %p209
        $region34: #{tpu_custom_call.1} parent=11 // pred_check_branch
          %352 = sbr.rel (%p350) target = $region36
        $region35: #{tpu_custom_call.1} parent=11 // pred_region
          %s354 = ssub.s32 1024, 1024
          %355 = vsyncadd [#allocation12], %s354
          %s356 = sshll.u32 [#allocation13], 4
          %s357 = int_to_ptr.vmem [resolvable:$true] %s356
          %362 = dma.hbm_to_vmem [thread:$0]  %s6, 1024, %s357, [#allocation12], 64, 64, 4
        $region36: #{tpu_custom_call.1} parent=11 // pred_fallthru
          _
        // Predicated region
        $region37: #{tpu_custom_call.1} parent=11 // pred_check
          %p363 = pneg %p230
        $region38: #{tpu_custom_call.1} parent=11 // pred_check_branch
          %365 = sbr.rel (%p363) target = $region40
        $region39: #{tpu_custom_call.1} parent=11 // pred_region
          _
        $region40: #{tpu_custom_call.1} parent=11 // pred_fallthru
          _
      $region12: #{tpu_custom_call.1} parent=5 // pred_fallthru
        _
      %p366 = scmp.lt.s32.totalorder %s27, 2
      // Predicated region
      $region41: #{tpu_custom_call.1} parent=5 // pred_check
        %p367 = pneg %p366
      $region42: #{tpu_custom_call.1} parent=5 // pred_check_branch
        %369 = sbr.rel (%p367) target = $region44
      $region43: #{tpu_custom_call.1} parent=5 // pred_region
        // Predicated region
        $region45: #{tpu_custom_call.1} parent=43 // pred_check
          %p370 = pneg %p98
        $region46: #{tpu_custom_call.1} parent=43 // pred_check_branch
          %372 = sbr.rel (%p370) target = $region48
        $region47: #{tpu_custom_call.1} parent=43 // pred_region
          %s373 = sand.u32 %s27, 1
          %s374 = scalar_lea.sflag [#allocation9], %s373
          %s375 = sand.u32 %s88, 1
          %s376 = smul.addr %s375, 64
          %s377 = scalar_lea.vmem [#allocation8], %s376
          %s378 = ssub.s32 1, %s34
          %s379 = smul.u32 %s36, %s378
          %s380 = smul.u32 16, %s379
          %s382 = ssub.s32 1024, 1024
          %383 = vsyncadd %s374, %s382
          %s384 = smul.addr %s380, 64
          %s385 = scalar_lea.hbm %s1, %s384
          %s386 = sshll.u32 %s377, 4
          %s387 = int_to_ptr.vmem [resolvable:$true] %s386
          %392 = dma.hbm_to_vmem [thread:$0]  %s385, 1024, %s387, %s374, 64, 64, 4
        $region48: #{tpu_custom_call.1} parent=43 // pred_fallthru
          _
      $region44: #{tpu_custom_call.1} parent=5 // pred_fallthru
        _
      %p393 = scmp.le.s32.totalorder 1, %s27
      %p394 = scmp.lt.s32.totalorder %s27, 3
      %p395 = pnand %p393, %p394
      %p396 = pneg %p395
      // Predicated region
      $region49: #{tpu_custom_call.1} parent=5 // pred_check
        _
      $region50: #{tpu_custom_call.1} parent=5 // pred_check_branch
        %398 = sbr.rel (%p395) target = $region52
      $region51: #{tpu_custom_call.1} parent=5 // pred_region
        %s399 = ssub.s32 %s27, 1
        // Predicated region
        $region53: #{tpu_custom_call.1} parent=51 // pred_check
          %p400 = pneg %p74
        $region54: #{tpu_custom_call.1} parent=51 // pred_check_branch
          %402 = sbr.rel (%p400) target = $region56
        $region55: #{tpu_custom_call.1} parent=51 // pred_region
          %403 = dma.done [#allocation6], 1024
        $region56: #{tpu_custom_call.1} parent=51 // pred_fallthru
          _
        %s404 = sand.u32 %s32, 1
        %s405 = scalar_lea.sflag [#allocation9], %s404
        %s406 = sand.u32 %s91, 1
        %s407 = smul.addr %s406, 64
        %s408 = scalar_lea.vmem [#allocation8], %s407
        // Predicated region
        $region57: #{tpu_custom_call.1} parent=51 // pred_check
          %p409 = pneg %p104
        $region58: #{tpu_custom_call.1} parent=51 // pred_check_branch
          %411 = sbr.rel (%p409) target = $region60
        $region59: #{tpu_custom_call.1} parent=51 // pred_region
          %412 = dma.done %s405, 1024
        $region60: #{tpu_custom_call.1} parent=51 // pred_fallthru
          _
        // Predicated region
        $region61: #{tpu_custom_call.1} parent=51 // pred_check
          %p413 = pneg %p125
        $region62: #{tpu_custom_call.1} parent=51 // pred_check_branch
          %415 = sbr.rel (%p413) target = $region64
        $region63: #{tpu_custom_call.1} parent=51 // pred_region
          %416 = dma.done [#allocation9], 1024
        $region64: #{tpu_custom_call.1} parent=51 // pred_fallthru
          _
        // Predicated region
        $region65: #{tpu_custom_call.1} parent=51 // pred_check
          %p417 = pneg %p167
        $region66: #{tpu_custom_call.1} parent=51 // pred_check_branch
          %419 = sbr.rel (%p417) target = $region68
        $region67: #{tpu_custom_call.1} parent=51 // pred_region
          %420 = dma.done [#allocation12], 1024
        $region68: #{tpu_custom_call.1} parent=51 // pred_fallthru
          _
        // Predicated region
        $region69: #{tpu_custom_call.1} parent=51 // pred_check
          %p421 = pneg %p209
        $region70: #{tpu_custom_call.1} parent=51 // pred_check_branch
          %423 = sbr.rel (%p421) target = $region72
        $region71: #{tpu_custom_call.1} parent=51 // pred_region
          %424 = dma.done [#allocation12], 1024
        $region72: #{tpu_custom_call.1} parent=51 // pred_fallthru
          _
        %p425 = pneg %p74
        %p426 = pneg %p71
        %s427 = sand.u32 %s32, 1
        %s428 = scalar_lea.sflag [#allocation9], %s427
        %s429 = sand.u32 %s91, 1
        %s430 = smul.addr %s429, 64
        %s431 = scalar_lea.vmem [#allocation8], %s430
        %p432 = pneg %p104
        %p433 = pneg %p101
        %p434 = pneg %p125
        %p435 = pneg %p122
        %p436 = pneg %p146
        %p437 = pneg %p143
        %p438 = pneg %p167
        %p439 = pneg %p164
        %p440 = pneg %p188
        %p441 = pneg %p185
        %p442 = pneg %p209
        %p443 = pneg %p206
        %p444 = pneg %p230
        %p445 = pneg %p227
        %p446 = pneg %p258
        %p447 = pneg %p255
        %s448 = sand.u32 %s245, 1
        %s449 = scalar_lea.sflag [#allocation7], %s448
        %s450 = sand.u32 %s245, 1
        %s451 = smul.addr %s450, 128
        %s452 = scalar_lea.vmem [#allocation14], %s451
        %p453 = pneg %p286
        %p454 = pneg %p283
        %s455 = sand.u32 %s273, 1
        %s456 = scalar_lea.sflag [#allocation16], %s455
        %s457 = sand.u32 %s273, 1
        %s458 = smul.addr %s457, 128
        %s459 = scalar_lea.vmem [#allocation15], %s458
        %s460 = smul.u32 16, %s38
        %s461 = ssub.s32 1, %s37
        %s462 = smul.u32 %s39, %s461
        %s463 = smul.u32 16, %s462
        %s464 = smul.u32 %s38, %s37
        %s465 = smul.u32 16, %s464
        %s466 = smul.u32 %s38, %s37
        %s467 = smul.u32 16, %s466
        %s469 = smul.u32 %s38, 128
        %s470 = smul.u32 %s39, 128
        %v471 = vld [vmem:[#allocation5] sm:$0xf]
        %v472 = vld [vmem:[#allocation5 + $0x4] sm:$0xf]
        %v473 = vld [vmem:[#allocation5 + $0x8] sm:$0xf]
        %v474 = vld [vmem:[#allocation5 + $0xc] sm:$0xf]
        %v475 = vld [vmem:[#allocation5 + $0x10] sm:$0xf]
        %v476 = vld [vmem:[#allocation5 + $0x14] sm:$0xf]
        %v477 = vld [vmem:[#allocation5 + $0x18] sm:$0xf]
        %v478 = vld [vmem:[#allocation5 + $0x1c] sm:$0xf]
        %v479 = vld [vmem:[#allocation5 + $0x20] sm:$0xf]
        %v480 = vld [vmem:[#allocation5 + $0x24] sm:$0xf]
        %v481 = vld [vmem:[#allocation5 + $0x28] sm:$0xf]
        %v482 = vld [vmem:[#allocation5 + $0x2c] sm:$0xf]
        %v483 = vld [vmem:[#allocation5 + $0x30] sm:$0xf]
        %v484 = vld [vmem:[#allocation5 + $0x34] sm:$0xf]
        %v485 = vld [vmem:[#allocation5 + $0x38] sm:$0xf]
        %v486 = vld [vmem:[#allocation5 + $0x3c] sm:$0xf]
        %p487 = scmp.eq.s32.totalorder %s37, 0
        // Predicated region
        $region73: #{tpu_custom_call.1} parent=51 // pred_check
          %p488 = pneg %p487
        $region74: #{tpu_custom_call.1} parent=51 // pred_check_branch
          %490 = sbr.rel (%p488) target = $region76
        $region75: #{tpu_custom_call.1} parent=51 // pred_region
          %p491 = scmp.eq.s32.totalorder %s39, 0
          // Predicated region
          $region77: #{tpu_custom_call.1} parent=75 // pred_check
            %p492 = pneg %p491
          $region78: #{tpu_custom_call.1} parent=75 // pred_check_branch
            %494 = sbr.rel (%p492) target = $region80
          $region79: #{tpu_custom_call.1} parent=75 // pred_region
            %495 = vst [vmem:[#allocation3] sm:$0xff] 0.0
            %496 = vst [vmem:[#allocation3 + $0x8] sm:$0xff] 0.0
            %497 = vst [vmem:[#allocation3 + $0x10] sm:$0xff] 0.0
            %498 = vst [vmem:[#allocation3 + $0x18] sm:$0xff] 0.0
            %499 = vst [vmem:[#allocation3 + $0x20] sm:$0xff] 0.0
            %500 = vst [vmem:[#allocation3 + $0x28] sm:$0xff] 0.0
            %501 = vst [vmem:[#allocation3 + $0x30] sm:$0xff] 0.0
            %502 = vst [vmem:[#allocation3 + $0x38] sm:$0xff] 0.0
            %503 = vst [vmem:[#allocation3 + $0x40] sm:$0xff] 0.0
            %504 = vst [vmem:[#allocation3 + $0x48] sm:$0xff] 0.0
            %505 = vst [vmem:[#allocation3 + $0x50] sm:$0xff] 0.0
            %506 = vst [vmem:[#allocation3 + $0x58] sm:$0xff] 0.0
            %507 = vst [vmem:[#allocation3 + $0x60] sm:$0xff] 0.0
            %508 = vst [vmem:[#allocation3 + $0x68] sm:$0xff] 0.0
            %509 = vst [vmem:[#allocation3 + $0x70] sm:$0xff] 0.0
            %510 = vst [vmem:[#allocation3 + $0x78] sm:$0xff] 0.0
          $region80: #{tpu_custom_call.1} parent=75 // pred_fallthru
            _
          %v511 = vld [vmem:[#allocation3] sm:$0xff]
          %v512 = vld [vmem:[#allocation3 + $0x8] sm:$0xff]
          %v513 = vld [vmem:[#allocation3 + $0x10] sm:$0xff]
          %v514 = vld [vmem:[#allocation3 + $0x18] sm:$0xff]
          %v515 = vld [vmem:[#allocation3 + $0x20] sm:$0xff]
          %v516 = vld [vmem:[#allocation3 + $0x28] sm:$0xff]
          %v517 = vld [vmem:[#allocation3 + $0x30] sm:$0xff]
          %v518 = vld [vmem:[#allocation3 + $0x38] sm:$0xff]
          %v519 = vld [vmem:[#allocation3 + $0x40] sm:$0xff]
          %v520 = vld [vmem:[#allocation3 + $0x48] sm:$0xff]
          %v521 = vld [vmem:[#allocation3 + $0x50] sm:$0xff]
          %v522 = vld [vmem:[#allocation3 + $0x58] sm:$0xff]
          %v523 = vld [vmem:[#allocation3 + $0x60] sm:$0xff]
          %v524 = vld [vmem:[#allocation3 + $0x68] sm:$0xff]
          %v525 = vld [vmem:[#allocation3 + $0x70] sm:$0xff]
          %v526 = vld [vmem:[#allocation3 + $0x78] sm:$0xff]
          %v527 = vld [vmem:[%s408] sm:$0xf]
          %v528 = vld [vmem:[%s408 + $0x4] sm:$0xf]
          %v529 = vld [vmem:[%s408 + $0x8] sm:$0xf]
          %v530 = vld [vmem:[%s408 + $0xc] sm:$0xf]
          %v531 = vld [vmem:[%s408 + $0x10] sm:$0xf]
          %v532 = vld [vmem:[%s408 + $0x14] sm:$0xf]
          %v533 = vld [vmem:[%s408 + $0x18] sm:$0xf]
          %v534 = vld [vmem:[%s408 + $0x1c] sm:$0xf]
          %v535 = vld [vmem:[%s408 + $0x20] sm:$0xf]
          %v536 = vld [vmem:[%s408 + $0x24] sm:$0xf]
          %v537 = vld [vmem:[%s408 + $0x28] sm:$0xf]
          %v538 = vld [vmem:[%s408 + $0x2c] sm:$0xf]
          %v539 = vld [vmem:[%s408 + $0x30] sm:$0xf]
          %v540 = vld [vmem:[%s408 + $0x34] sm:$0xf]
          %v541 = vld [vmem:[%s408 + $0x38] sm:$0xf]
          %v542 = vld [vmem:[%s408 + $0x3c] sm:$0xf]
          %v559 = vunpack.c.l.b16 %v471
          %v560 = vunpack.c.l.b16 %v472
          %v561 = vunpack.c.l.b16 %v473
          %v562 = vunpack.c.l.b16 %v474
          %v563 = vunpack.c.l.b16 %v475
          %v564 = vunpack.c.l.b16 %v476
          %v565 = vunpack.c.l.b16 %v477
          %v566 = vunpack.c.l.b16 %v478
          %v567 = vunpack.c.l.b16 %v479
          %v568 = vunpack.c.l.b16 %v480
          %v569 = vunpack.c.l.b16 %v481
          %v570 = vunpack.c.l.b16 %v482
          %v571 = vunpack.c.l.b16 %v483
          %v572 = vunpack.c.l.b16 %v484
          %v573 = vunpack.c.l.b16 %v485
          %v574 = vunpack.c.l.b16 %v486
          %v575 = vpack.c.b16 %v560, %v559
          %v576 = vpack.c.b16 %v562, %v561
          %v577 = vpack.c.b16 %v564, %v563
          %v578 = vpack.c.b16 %v566, %v565
          %v579 = vpack.c.b16 %v568, %v567
          %v580 = vpack.c.b16 %v570, %v569
          %v581 = vpack.c.b16 %v572, %v571
          %v582 = vpack.c.b16 %v574, %v573
          %v607 = vunpack.c.l.b16 %v527
          %v608 = vunpack.c.l.b16 %v528
          %v609 = vunpack.c.l.b16 %v529
          %v610 = vunpack.c.l.b16 %v530
          %v611 = vunpack.c.l.b16 %v531
          %v612 = vunpack.c.l.b16 %v532
          %v613 = vunpack.c.l.b16 %v533
          %v614 = vunpack.c.l.b16 %v534
          %v615 = vunpack.c.l.b16 %v535
          %v616 = vunpack.c.l.b16 %v536
          %v617 = vunpack.c.l.b16 %v537
          %v618 = vunpack.c.l.b16 %v538
          %v619 = vunpack.c.l.b16 %v539
          %v620 = vunpack.c.l.b16 %v540
          %v621 = vunpack.c.l.b16 %v541
          %v622 = vunpack.c.l.b16 %v542
          %v623 = vpack.c.b16 %v608, %v607
          %v624 = vpack.c.b16 %v610, %v609
          %v625 = vpack.c.b16 %v612, %v611
          %v626 = vpack.c.b16 %v614, %v613
          %v627 = vpack.c.b16 %v616, %v615
          %v628 = vpack.c.b16 %v618, %v617
          %v629 = vpack.c.b16 %v620, %v619
          %v630 = vpack.c.b16 %v622, %v621
          %639 = vmatprep.subr.bf16.mxu0 0
          %640 = vmatpush1.bf16.msra.mxu0 %v623
          %641 = vmatprep.subr.bf16.mxu0 0
          %642 = vmatpush1.bf16.msra.mxu0 %v624
          %643 = vmatprep.subr.bf16.mxu0 0
          %644 = vmatpush1.bf16.msra.mxu0 %v625
          %645 = vmatprep.subr.bf16.mxu0 0
          %646 = vmatpush1.bf16.msra.mxu0 %v626
          %647 = vmatprep.subr.bf16.mxu0 0
          %648 = vmatpush1.bf16.msra.mxu0 %v627
          %649 = vmatprep.subr.bf16.mxu0 0
          %650 = vmatpush1.bf16.msra.mxu0 %v628
          %651 = vmatprep.subr.bf16.mxu0 0
          %652 = vmatpush1.bf16.msra.mxu0 %v629
          %653 = vmatprep.subr.bf16.mxu0 0
          %654 = vmatpush1.bf16.msra.mxu0 %v630
          %655 = vmatprep.subr.bf16.mxu0 0
          %656 = vmatpush1.bf16.msra.mxu0 0
          %657 = vmatprep.subr.bf16.mxu0 0
          %658 = vmatpush1.bf16.msra.mxu0 0
          %659 = vmatprep.subr.bf16.mxu0 0
          %660 = vmatpush1.bf16.msra.mxu0 0
          %661 = vmatprep.subr.bf16.mxu0 0
          %662 = vmatpush1.bf16.msra.mxu0 0
          %663 = vmatprep.subr.bf16.mxu0 0
          %664 = vmatpush1.bf16.msra.mxu0 0
          %665 = vmatprep.subr.bf16.mxu0 0
          %666 = vmatpush1.bf16.msra.mxu0 0
          %667 = vmatprep.subr.bf16.mxu0 0
          %668 = vmatpush1.bf16.msra.mxu0 0
          %669 = vmatprep.subr.bf16.mxu0 0
          %670 = vmatpush1.bf16.msra.mxu0 0
          %671 = vmatprep.mubr.bf16.mxu0 0
          %672 = vmatmul.mubr.bf16.gmra.mrb[0].mxu0 %v575
          %v673 = vpop.f32.mrb[0].mxu0
          %v674 = vadd.f32 0.0, %v673
          %v675 = vpop.f32.mrb[0].mxu0
          %v676 = vpop.f32.mrb[0].mxu0
          %v677 = vadd.f32 0.0, %v676
          %v678 = vpop.f32.mrb[0].mxu0
          %679 = vmatprep.mubr.bf16.mxu0 0
          %680 = vmatmul.mubr.bf16.gmra.mrb[0].mxu0 %v576
          %v681 = vpop.f32.mrb[0].mxu0
          %v682 = vadd.f32 0.0, %v681
          %v683 = vpop.f32.mrb[0].mxu0
          %v684 = vpop.f32.mrb[0].mxu0
          %v685 = vadd.f32 0.0, %v684
          %v686 = vpop.f32.mrb[0].mxu0
          %687 = vmatprep.mubr.bf16.mxu0 0
          %688 = vmatmul.mubr.bf16.gmra.mrb[0].mxu0 %v577
          %v689 = vpop.f32.mrb[0].mxu0
          %v690 = vadd.f32 0.0, %v689
          %v691 = vpop.f32.mrb[0].mxu0
          %v692 = vpop.f32.mrb[0].mxu0
          %v693 = vadd.f32 0.0, %v692
          %v694 = vpop.f32.mrb[0].mxu0
          %695 = vmatprep.mubr.bf16.mxu0 0
          %696 = vmatmul.mubr.bf16.gmra.mrb[0].mxu0 %v578
          %v697 = vpop.f32.mrb[0].mxu0
          %v698 = vadd.f32 0.0, %v697
          %v699 = vpop.f32.mrb[0].mxu0
          %v700 = vpop.f32.mrb[0].mxu0
          %v701 = vadd.f32 0.0, %v700
          %v702 = vpop.f32.mrb[0].mxu0
          %703 = vmatprep.mubr.bf16.mxu0 0
          %704 = vmatmul.mubr.bf16.gmra.mrb[0].mxu0 %v579
          %v705 = vpop.f32.mrb[0].mxu0
          %v706 = vadd.f32 0.0, %v705
          %v707 = vpop.f32.mrb[0].mxu0
          %v708 = vpop.f32.mrb[0].mxu0
          %v709 = vadd.f32 0.0, %v708
          %v710 = vpop.f32.mrb[0].mxu0
          %711 = vmatprep.mubr.bf16.mxu0 0
          %712 = vmatmul.mubr.bf16.gmra.mrb[0].mxu0 %v580
          %v713 = vpop.f32.mrb[0].mxu0
          %v714 = vadd.f32 0.0, %v713
          %v715 = vpop.f32.mrb[0].mxu0
          %v716 = vpop.f32.mrb[0].mxu0
          %v717 = vadd.f32 0.0, %v716
          %v718 = vpop.f32.mrb[0].mxu0
          %719 = vmatprep.mubr.bf16.mxu0 0
          %720 = vmatmul.mubr.bf16.gmra.mrb[0].mxu0 %v581
          %v721 = vpop.f32.mrb[0].mxu0
          %v722 = vadd.f32 0.0, %v721
          %v723 = vpop.f32.mrb[0].mxu0
          %v724 = vpop.f32.mrb[0].mxu0
          %v725 = vadd.f32 0.0, %v724
          %v726 = vpop.f32.mrb[0].mxu0
          %727 = vmatprep.mubr.bf16.mxu0 0
          %728 = vmatmul.mubr.bf16.gmra.mrb[0].mxu0 %v582
          %v729 = vpop.f32.mrb[0].mxu0
          %v730 = vadd.f32 0.0, %v729
          %v731 = vpop.f32.mrb[0].mxu0
          %v732 = vpop.f32.mrb[0].mxu0
          %v733 = vadd.f32 0.0, %v732
          %v734 = vpop.f32.mrb[0].mxu0
          %735 = vdwg.mxu0
          %v736 = vadd.f32 %v511, %v674
          %v737 = vadd.f32 %v512, %v677
          %v738 = vadd.f32 %v513, %v682
          %v739 = vadd.f32 %v514, %v685
          %v740 = vadd.f32 %v515, %v690
          %v741 = vadd.f32 %v516, %v693
          %v742 = vadd.f32 %v517, %v698
          %v743 = vadd.f32 %v518, %v701
          %v744 = vadd.f32 %v519, %v706
          %v745 = vadd.f32 %v520, %v709
          %v746 = vadd.f32 %v521, %v714
          %v747 = vadd.f32 %v522, %v717
          %v748 = vadd.f32 %v523, %v722
          %v749 = vadd.f32 %v524, %v725
          %v750 = vadd.f32 %v525, %v730
          %v751 = vadd.f32 %v526, %v733
          %752 = vst [vmem:[#allocation3] sm:$0xff] %v736
          %753 = vst [vmem:[#allocation3 + $0x8] sm:$0xff] %v737
          %754 = vst [vmem:[#allocation3 + $0x10] sm:$0xff] %v738
          %755 = vst [vmem:[#allocation3 + $0x18] sm:$0xff] %v739
          %756 = vst [vmem:[#allocation3 + $0x20] sm:$0xff] %v740
          %757 = vst [vmem:[#allocation3 + $0x28] sm:$0xff] %v741
          %758 = vst [vmem:[#allocation3 + $0x30] sm:$0xff] %v742
          %759 = vst [vmem:[#allocation3 + $0x38] sm:$0xff] %v743
          %760 = vst [vmem:[#allocation3 + $0x40] sm:$0xff] %v744
          %761 = vst [vmem:[#allocation3 + $0x48] sm:$0xff] %v745
          %762 = vst [vmem:[#allocation3 + $0x50] sm:$0xff] %v746
          %763 = vst [vmem:[#allocation3 + $0x58] sm:$0xff] %v747
          %764 = vst [vmem:[#allocation3 + $0x60] sm:$0xff] %v748
          %765 = vst [vmem:[#allocation3 + $0x68] sm:$0xff] %v749
          %766 = vst [vmem:[#allocation3 + $0x70] sm:$0xff] %v750
          %767 = vst [vmem:[#allocation3 + $0x78] sm:$0xff] %v751
          // Predicated region
          $region81: #{tpu_custom_call.1} parent=75 // pred_check
            %p768 = pneg %p491
          $region82: #{tpu_custom_call.1} parent=75 // pred_check_branch
            %770 = sbr.rel (%p768) target = $region84
          $region83: #{tpu_custom_call.1} parent=75 // pred_region
            %v771 = vld [vmem:[#allocation3] sm:$0xff]
            %v772 = vld [vmem:[#allocation3 + $0x8] sm:$0xff]
            %v773 = vld [vmem:[#allocation3 + $0x10] sm:$0xff]
            %v774 = vld [vmem:[#allocation3 + $0x18] sm:$0xff]
            %v775 = vld [vmem:[#allocation3 + $0x20] sm:$0xff]
            %v776 = vld [vmem:[#allocation3 + $0x28] sm:$0xff]
            %v777 = vld [vmem:[#allocation3 + $0x30] sm:$0xff]
            %v778 = vld [vmem:[#allocation3 + $0x38] sm:$0xff]
            %v779 = vld [vmem:[#allocation3 + $0x40] sm:$0xff]
            %v780 = vld [vmem:[#allocation3 + $0x48] sm:$0xff]
            %v781 = vld [vmem:[#allocation3 + $0x50] sm:$0xff]
            %v782 = vld [vmem:[#allocation3 + $0x58] sm:$0xff]
            %v783 = vld [vmem:[#allocation3 + $0x60] sm:$0xff]
            %v784 = vld [vmem:[#allocation3 + $0x68] sm:$0xff]
            %v785 = vld [vmem:[#allocation3 + $0x70] sm:$0xff]
            %v786 = vld [vmem:[#allocation3 + $0x78] sm:$0xff]
            %v787 = vpack.c.bf16 %v772, %v771
            %v788 = vpack.c.bf16 %v774, %v773
            %v789 = vpack.c.bf16 %v776, %v775
            %v790 = vpack.c.bf16 %v778, %v777
            %v791 = vpack.c.bf16 %v780, %v779
            %v792 = vpack.c.bf16 %v782, %v781
            %v793 = vpack.c.bf16 %v784, %v783
            %v794 = vpack.c.bf16 %v786, %v785
            %v795 = vld [vmem:[#allocation10] sm:$0xf]
            %v796 = vld [vmem:[#allocation10 + $0x4] sm:$0xf]
            %v797 = vld [vmem:[#allocation10 + $0x8] sm:$0xf]
            %v798 = vld [vmem:[#allocation10 + $0xc] sm:$0xf]
            %v799 = vld [vmem:[#allocation10 + $0x10] sm:$0xf]
            %v800 = vld [vmem:[#allocation10 + $0x14] sm:$0xf]
            %v801 = vld [vmem:[#allocation10 + $0x18] sm:$0xf]
            %v802 = vld [vmem:[#allocation10 + $0x1c] sm:$0xf]
            %v803 = vld [vmem:[#allocation10 + $0x20] sm:$0xf]
            %v804 = vld [vmem:[#allocation10 + $0x24] sm:$0xf]
            %v805 = vld [vmem:[#allocation10 + $0x28] sm:$0xf]
            %v806 = vld [vmem:[#allocation10 + $0x2c] sm:$0xf]
            %v807 = vld [vmem:[#allocation10 + $0x30] sm:$0xf]
            %v808 = vld [vmem:[#allocation10 + $0x34] sm:$0xf]
            %v809 = vld [vmem:[#allocation10 + $0x38] sm:$0xf]
            %v810 = vld [vmem:[#allocation10 + $0x3c] sm:$0xf]
            %v811 = vld [vmem:[%s3] sm:$0x1]
            %v813 = vlaneseq
            %v814 = vshrl.u32 %v813, 7
            %v815 = vsub.s32 0, %v814
            %v816 = vrot.slane %v811, %v815
            %v834 = vunpack.c.l.b16 %v795
            %v835 = vunpack.c.l.b16 %v796
            %v836 = vunpack.c.l.b16 %v797
            %v837 = vunpack.c.l.b16 %v798
            %v838 = vunpack.c.l.b16 %v799
            %v839 = vunpack.c.l.b16 %v800
            %v840 = vunpack.c.l.b16 %v801
            %v841 = vunpack.c.l.b16 %v802
            %v842 = vunpack.c.l.b16 %v803
            %v843 = vunpack.c.l.b16 %v804
            %v844 = vunpack.c.l.b16 %v805
            %v845 = vunpack.c.l.b16 %v806
            %v846 = vunpack.c.l.b16 %v807
            %v847 = vunpack.c.l.b16 %v808
            %v848 = vunpack.c.l.b16 %v809
            %v849 = vunpack.c.l.b16 %v810
            %v850 = vpack.c.b16 %v835, %v834
            %v851 = vpack.c.b16 %v837, %v836
            %v852 = vpack.c.b16 %v839, %v838
            %v853 = vpack.c.b16 %v841, %v840
            %v854 = vpack.c.b16 %v843, %v842
            %v855 = vpack.c.b16 %v845, %v844
            %v856 = vpack.c.b16 %v847, %v846
            %v857 = vpack.c.b16 %v849, %v848
            %866 = vmatprep.subr.bf16.mxu0 0
            %867 = vmatpush1.bf16.msra.mxu0 %v850
            %868 = vmatprep.subr.bf16.mxu0 0
            %869 = vmatpush1.bf16.msra.mxu0 %v851
            %870 = vmatprep.subr.bf16.mxu0 0
            %871 = vmatpush1.bf16.msra.mxu0 %v852
            %872 = vmatprep.subr.bf16.mxu0 0
            %873 = vmatpush1.bf16.msra.mxu0 %v853
            %874 = vmatprep.subr.bf16.mxu0 0
            %875 = vmatpush1.bf16.msra.mxu0 %v854
            %876 = vmatprep.subr.bf16.mxu0 0
            %877 = vmatpush1.bf16.msra.mxu0 %v855
            %878 = vmatprep.subr.bf16.mxu0 0
            %879 = vmatpush1.bf16.msra.mxu0 %v856
            %880 = vmatprep.subr.bf16.mxu0 0
            %881 = vmatpush1.bf16.msra.mxu0 %v857
            %882 = vmatprep.subr.bf16.mxu0 0
            %883 = vmatpush1.bf16.msra.mxu0 0
            %884 = vmatprep.subr.bf16.mxu0 0
            %885 = vmatpush1.bf16.msra.mxu0 0
            %886 = vmatprep.subr.bf16.mxu0 0
            %887 = vmatpush1.bf16.msra.mxu0 0
            %888 = vmatprep.subr.bf16.mxu0 0
            %889 = vmatpush1.bf16.msra.mxu0 0
            %890 = vmatprep.subr.bf16.mxu0 0
            %891 = vmatpush1.bf16.msra.mxu0 0
            %892 = vmatprep.subr.bf16.mxu0 0
            %893 = vmatpush1.bf16.msra.mxu0 0
            %894 = vmatprep.subr.bf16.mxu0 0
            %895 = vmatpush1.bf16.msra.mxu0 0
            %896 = vmatprep.subr.bf16.mxu0 0
            %897 = vmatpush1.bf16.msra.mxu0 0
            %898 = vmatprep.mubr.bf16.mxu0 0
            %899 = vmatmul.mubr.bf16.gmra.mrb[0].mxu0 %v787
            %v900 = vpop.f32.mrb[0].mxu0
            %v901 = vadd.f32 %v816, %v900
            %v902 = vpop.f32.mrb[0].mxu0
            %v903 = vpop.f32.mrb[0].mxu0
            %v904 = vadd.f32 %v816, %v903
            %v905 = vpop.f32.mrb[0].mxu0
            %906 = vmatprep.mubr.bf16.mxu0 0
            %907 = vmatmul.mubr.bf16.gmra.mrb[0].mxu0 %v788
            %v908 = vpop.f32.mrb[0].mxu0
            %v909 = vadd.f32 %v816, %v908
            %v910 = vpop.f32.mrb[0].mxu0
            %v911 = vpop.f32.mrb[0].mxu0
            %v912 = vadd.f32 %v816, %v911
            %v913 = vpop.f32.mrb[0].mxu0
            %914 = vmatprep.mubr.bf16.mxu0 0
            %915 = vmatmul.mubr.bf16.gmra.mrb[0].mxu0 %v789
            %v916 = vpop.f32.mrb[0].mxu0
            %v917 = vadd.f32 %v816, %v916
            %v918 = vpop.f32.mrb[0].mxu0
            %v919 = vpop.f32.mrb[0].mxu0
            %v920 = vadd.f32 %v816, %v919
            %v921 = vpop.f32.mrb[0].mxu0
            %922 = vmatprep.mubr.bf16.mxu0 0
            %923 = vmatmul.mubr.bf16.gmra.mrb[0].mxu0 %v790
            %v924 = vpop.f32.mrb[0].mxu0
            %v925 = vadd.f32 %v816, %v924
            %v926 = vpop.f32.mrb[0].mxu0
            %v927 = vpop.f32.mrb[0].mxu0
            %v928 = vadd.f32 %v816, %v927
            %v929 = vpop.f32.mrb[0].mxu0
            %930 = vmatprep.mubr.bf16.mxu0 0
            %931 = vmatmul.mubr.bf16.gmra.mrb[0].mxu0 %v791
            %v932 = vpop.f32.mrb[0].mxu0
            %v933 = vadd.f32 %v816, %v932
            %v934 = vpop.f32.mrb[0].mxu0
            %v935 = vpop.f32.mrb[0].mxu0
            %v936 = vadd.f32 %v816, %v935
            %v937 = vpop.f32.mrb[0].mxu0
            %938 = vmatprep.mubr.bf16.mxu0 0
            %939 = vmatmul.mubr.bf16.gmra.mrb[0].mxu0 %v792
            %v940 = vpop.f32.mrb[0].mxu0
            %v941 = vadd.f32 %v816, %v940
            %v942 = vpop.f32.mrb[0].mxu0
            %v943 = vpop.f32.mrb[0].mxu0
            %v944 = vadd.f32 %v816, %v943
            %v945 = vpop.f32.mrb[0].mxu0
            %946 = vmatprep.mubr.bf16.mxu0 0
            %947 = vmatmul.mubr.bf16.gmra.mrb[0].mxu0 %v793
            %v948 = vpop.f32.mrb[0].mxu0
            %v949 = vadd.f32 %v816, %v948
            %v950 = vpop.f32.mrb[0].mxu0
            %v951 = vpop.f32.mrb[0].mxu0
            %v952 = vadd.f32 %v816, %v951
            %v953 = vpop.f32.mrb[0].mxu0
            %954 = vmatprep.mubr.bf16.mxu0 0
            %955 = vmatmul.mubr.bf16.gmra.mrb[0].mxu0 %v794
            %v956 = vpop.f32.mrb[0].mxu0
            %v957 = vadd.f32 %v816, %v956
            %v958 = vpop.f32.mrb[0].mxu0
            %v959 = vpop.f32.mrb[0].mxu0
            %v960 = vadd.f32 %v816, %v959
            %v961 = vpop.f32.mrb[0].mxu0
            %962 = vdwg.mxu0
            %v963 = vmax.f32 %v901, 0.0
            %v964 = vmax.f32 %v904, 0.0
            %v965 = vmax.f32 %v909, 0.0
            %v966 = vmax.f32 %v912, 0.0
            %v967 = vmax.f32 %v917, 0.0
            %v968 = vmax.f32 %v920, 0.0
            %v969 = vmax.f32 %v925, 0.0
            %v970 = vmax.f32 %v928, 0.0
            %v971 = vmax.f32 %v933, 0.0
            %v972 = vmax.f32 %v936, 0.0
            %v973 = vmax.f32 %v941, 0.0
            %v974 = vmax.f32 %v944, 0.0
            %v975 = vmax.f32 %v949, 0.0
            %v976 = vmax.f32 %v952, 0.0
            %v977 = vmax.f32 %v957, 0.0
            %v978 = vmax.f32 %v960, 0.0
            %v979 = vpack.c.bf16 %v964, %v963
            %v980 = vpack.c.bf16 %v966, %v965
            %v981 = vpack.c.bf16 %v968, %v967
            %v982 = vpack.c.bf16 %v970, %v969
            %v983 = vpack.c.bf16 %v972, %v971
            %v984 = vpack.c.bf16 %v974, %v973
            %v985 = vpack.c.bf16 %v976, %v975
            %v986 = vpack.c.bf16 %v978, %v977
            %s987 = sshra.s32 %s469, 4
            %s988 = sand.u32 %s469, 15
            %s989 = smul.addr %s987, 8
            %s990 = scalar_lea.vmem [#allocation2], %s989
            %991 = vst [vmem:[%s990] sm:$0xff] %v979
            %992 = vst [vmem:[%s990 + $0x8] sm:$0xff] %v980
            %993 = vst [vmem:[%s990 + $0x10] sm:$0xff] %v981
            %994 = vst [vmem:[%s990 + $0x18] sm:$0xff] %v982
            %995 = vst [vmem:[%s990 + $0x20] sm:$0xff] %v983
            %996 = vst [vmem:[%s990 + $0x28] sm:$0xff] %v984
            %997 = vst [vmem:[%s990 + $0x30] sm:$0xff] %v985
            %998 = vst [vmem:[%s990 + $0x38] sm:$0xff] %v986
          $region84: #{tpu_custom_call.1} parent=75 // pred_fallthru
            _
        $region76: #{tpu_custom_call.1} parent=51 // pred_fallthru
          _
        %p999 = scmp.eq.s32.totalorder %s37, 1
        // Predicated region
        $region85: #{tpu_custom_call.1} parent=51 // pred_check
          %p1000 = pneg %p999
        $region86: #{tpu_custom_call.1} parent=51 // pred_check_branch
          %1002 = sbr.rel (%p1000) target = $region88
        $region87: #{tpu_custom_call.1} parent=51 // pred_region
          %p1003 = scmp.eq.s32.totalorder %s39, 0
          // Predicated region
          $region89: #{tpu_custom_call.1} parent=87 // pred_check
            %p1004 = pneg %p1003
          $region90: #{tpu_custom_call.1} parent=87 // pred_check_branch
            %1006 = sbr.rel (%p1004) target = $region92
          $region91: #{tpu_custom_call.1} parent=87 // pred_region
            %1007 = vst [vmem:[#allocation4] sm:$0xff] 0.0
            %1008 = vst [vmem:[#allocation4 + $0x8] sm:$0xff] 0.0
            %1009 = vst [vmem:[#allocation4 + $0x10] sm:$0xff] 0.0
            %1010 = vst [vmem:[#allocation4 + $0x18] sm:$0xff] 0.0
            %1011 = vst [vmem:[#allocation4 + $0x20] sm:$0xff] 0.0
            %1012 = vst [vmem:[#allocation4 + $0x28] sm:$0xff] 0.0
            %1013 = vst [vmem:[#allocation4 + $0x30] sm:$0xff] 0.0
            %1014 = vst [vmem:[#allocation4 + $0x38] sm:$0xff] 0.0
            %1015 = vst [vmem:[#allocation4 + $0x40] sm:$0xff] 0.0
            %1016 = vst [vmem:[#allocation4 + $0x48] sm:$0xff] 0.0
            %1017 = vst [vmem:[#allocation4 + $0x50] sm:$0xff] 0.0
            %1018 = vst [vmem:[#allocation4 + $0x58] sm:$0xff] 0.0
            %1019 = vst [vmem:[#allocation4 + $0x60] sm:$0xff] 0.0
            %1020 = vst [vmem:[#allocation4 + $0x68] sm:$0xff] 0.0
            %1021 = vst [vmem:[#allocation4 + $0x70] sm:$0xff] 0.0
            %1022 = vst [vmem:[#allocation4 + $0x78] sm:$0xff] 0.0
          $region92: #{tpu_custom_call.1} parent=87 // pred_fallthru
            _
          %v1023 = vld [vmem:[#allocation4] sm:$0xff]
          %v1024 = vld [vmem:[#allocation4 + $0x8] sm:$0xff]
          %v1025 = vld [vmem:[#allocation4 + $0x10] sm:$0xff]
          %v1026 = vld [vmem:[#allocation4 + $0x18] sm:$0xff]
          %v1027 = vld [vmem:[#allocation4 + $0x20] sm:$0xff]
          %v1028 = vld [vmem:[#allocation4 + $0x28] sm:$0xff]
          %v1029 = vld [vmem:[#allocation4 + $0x30] sm:$0xff]
          %v1030 = vld [vmem:[#allocation4 + $0x38] sm:$0xff]
          %v1031 = vld [vmem:[#allocation4 + $0x40] sm:$0xff]
          %v1032 = vld [vmem:[#allocation4 + $0x48] sm:$0xff]
          %v1033 = vld [vmem:[#allocation4 + $0x50] sm:$0xff]
          %v1034 = vld [vmem:[#allocation4 + $0x58] sm:$0xff]
          %v1035 = vld [vmem:[#allocation4 + $0x60] sm:$0xff]
          %v1036 = vld [vmem:[#allocation4 + $0x68] sm:$0xff]
          %v1037 = vld [vmem:[#allocation4 + $0x70] sm:$0xff]
          %v1038 = vld [vmem:[#allocation4 + $0x78] sm:$0xff]
          %s1039 = sshra.s32 %s470, 4
          %s1040 = sand.u32 %s470, 15
          %s1041 = smul.addr %s1039, 8
          %s1042 = scalar_lea.vmem [#allocation2], %s1041
          %v1043 = vld [vmem:[%s1042] sm:$0xff]
          %v1044 = vld [vmem:[%s1042 + $0x8] sm:$0xff]
          %v1045 = vld [vmem:[%s1042 + $0x10] sm:$0xff]
          %v1046 = vld [vmem:[%s1042 + $0x18] sm:$0xff]
          %v1047 = vld [vmem:[%s1042 + $0x20] sm:$0xff]
          %v1048 = vld [vmem:[%s1042 + $0x28] sm:$0xff]
          %v1049 = vld [vmem:[%s1042 + $0x30] sm:$0xff]
          %v1050 = vld [vmem:[%s1042 + $0x38] sm:$0xff]
          %v1067 = vunpack.c.l.b16 %v471
          %v1068 = vunpack.c.l.b16 %v472
          %v1069 = vunpack.c.l.b16 %v473
          %v1070 = vunpack.c.l.b16 %v474
          %v1071 = vunpack.c.l.b16 %v475
          %v1072 = vunpack.c.l.b16 %v476
          %v1073 = vunpack.c.l.b16 %v477
          %v1074 = vunpack.c.l.b16 %v478
          %v1075 = vunpack.c.l.b16 %v479
          %v1076 = vunpack.c.l.b16 %v480
          %v1077 = vunpack.c.l.b16 %v481
          %v1078 = vunpack.c.l.b16 %v482
          %v1079 = vunpack.c.l.b16 %v483
          %v1080 = vunpack.c.l.b16 %v484
          %v1081 = vunpack.c.l.b16 %v485
          %v1082 = vunpack.c.l.b16 %v486
          %v1083 = vpack.c.b16 %v1068, %v1067
          %v1084 = vpack.c.b16 %v1070, %v1069
          %v1085 = vpack.c.b16 %v1072, %v1071
          %v1086 = vpack.c.b16 %v1074, %v1073
          %v1087 = vpack.c.b16 %v1076, %v1075
          %v1088 = vpack.c.b16 %v1078, %v1077
          %v1089 = vpack.c.b16 %v1080, %v1079
          %v1090 = vpack.c.b16 %v1082, %v1081
          %1099 = vmatprep.subr.bf16.mxu0 0
          %1100 = vmatpush1.bf16.msra.mxu0 %v1043
          %1101 = vmatprep.subr.bf16.mxu0 0
          %1102 = vmatpush1.bf16.msra.mxu0 %v1044
          %1103 = vmatprep.subr.bf16.mxu0 0
          %1104 = vmatpush1.bf16.msra.mxu0 %v1045
          %1105 = vmatprep.subr.bf16.mxu0 0
          %1106 = vmatpush1.bf16.msra.mxu0 %v1046
          %1107 = vmatprep.subr.bf16.mxu0 0
          %1108 = vmatpush1.bf16.msra.mxu0 %v1047
          %1109 = vmatprep.subr.bf16.mxu0 0
          %1110 = vmatpush1.bf16.msra.mxu0 %v1048
          %1111 = vmatprep.subr.bf16.mxu0 0
          %1112 = vmatpush1.bf16.msra.mxu0 %v1049
          %1113 = vmatprep.subr.bf16.mxu0 0
          %1114 = vmatpush1.bf16.msra.mxu0 %v1050
          %1115 = vmatprep.subr.bf16.mxu0 0
          %1116 = vmatpush1.bf16.msra.mxu0 0
          %1117 = vmatprep.subr.bf16.mxu0 0
          %1118 = vmatpush1.bf16.msra.mxu0 0
          %1119 = vmatprep.subr.bf16.mxu0 0
          %1120 = vmatpush1.bf16.msra.mxu0 0
          %1121 = vmatprep.subr.bf16.mxu0 0
          %1122 = vmatpush1.bf16.msra.mxu0 0
          %1123 = vmatprep.subr.bf16.mxu0 0
          %1124 = vmatpush1.bf16.msra.mxu0 0
          %1125 = vmatprep.subr.bf16.mxu0 0
          %1126 = vmatpush1.bf16.msra.mxu0 0
          %1127 = vmatprep.subr.bf16.mxu0 0
          %1128 = vmatpush1.bf16.msra.mxu0 0
          %1129 = vmatprep.subr.bf16.mxu0 0
          %1130 = vmatpush1.bf16.msra.mxu0 0
          %1131 = vmatprep.mubr.bf16.mxu0 0
          %1132 = vmatmul.mubr.bf16.gmra.mrb[0].mxu0 %v1083
          %v1133 = vpop.f32.mrb[0].mxu0
          %v1134 = vadd.f32 0.0, %v1133
          %v1135 = vpop.f32.mrb[0].mxu0
          %v1136 = vpop.f32.mrb[0].mxu0
          %v1137 = vadd.f32 0.0, %v1136
          %v1138 = vpop.f32.mrb[0].mxu0
          %1139 = vmatprep.mubr.bf16.mxu0 0
          %1140 = vmatmul.mubr.bf16.gmra.mrb[0].mxu0 %v1084
          %v1141 = vpop.f32.mrb[0].mxu0
          %v1142 = vadd.f32 0.0, %v1141
          %v1143 = vpop.f32.mrb[0].mxu0
          %v1144 = vpop.f32.mrb[0].mxu0
          %v1145 = vadd.f32 0.0, %v1144
          %v1146 = vpop.f32.mrb[0].mxu0
          %1147 = vmatprep.mubr.bf16.mxu0 0
          %1148 = vmatmul.mubr.bf16.gmra.mrb[0].mxu0 %v1085
          %v1149 = vpop.f32.mrb[0].mxu0
          %v1150 = vadd.f32 0.0, %v1149
          %v1151 = vpop.f32.mrb[0].mxu0
          %v1152 = vpop.f32.mrb[0].mxu0
          %v1153 = vadd.f32 0.0, %v1152
          %v1154 = vpop.f32.mrb[0].mxu0
          %1155 = vmatprep.mubr.bf16.mxu0 0
          %1156 = vmatmul.mubr.bf16.gmra.mrb[0].mxu0 %v1086
          %v1157 = vpop.f32.mrb[0].mxu0
          %v1158 = vadd.f32 0.0, %v1157
          %v1159 = vpop.f32.mrb[0].mxu0
          %v1160 = vpop.f32.mrb[0].mxu0
          %v1161 = vadd.f32 0.0, %v1160
          %v1162 = vpop.f32.mrb[0].mxu0
          %1163 = vmatprep.mubr.bf16.mxu0 0
          %1164 = vmatmul.mubr.bf16.gmra.mrb[0].mxu0 %v1087
          %v1165 = vpop.f32.mrb[0].mxu0
          %v1166 = vadd.f32 0.0, %v1165
          %v1167 = vpop.f32.mrb[0].mxu0
          %v1168 = vpop.f32.mrb[0].mxu0
          %v1169 = vadd.f32 0.0, %v1168
          %v1170 = vpop.f32.mrb[0].mxu0
          %1171 = vmatprep.mubr.bf16.mxu0 0
          %1172 = vmatmul.mubr.bf16.gmra.mrb[0].mxu0 %v1088
          %v1173 = vpop.f32.mrb[0].mxu0
          %v1174 = vadd.f32 0.0, %v1173
          %v1175 = vpop.f32.mrb[0].mxu0
          %v1176 = vpop.f32.mrb[0].mxu0
          %v1177 = vadd.f32 0.0, %v1176
          %v1178 = vpop.f32.mrb[0].mxu0
          %1179 = vmatprep.mubr.bf16.mxu0 0
          %1180 = vmatmul.mubr.bf16.gmra.mrb[0].mxu0 %v1089
          %v1181 = vpop.f32.mrb[0].mxu0
          %v1182 = vadd.f32 0.0, %v1181
          %v1183 = vpop.f32.mrb[0].mxu0
          %v1184 = vpop.f32.mrb[0].mxu0
          %v1185 = vadd.f32 0.0, %v1184
          %v1186 = vpop.f32.mrb[0].mxu0
          %1187 = vmatprep.mubr.bf16.mxu0 0
          %1188 = vmatmul.mubr.bf16.gmra.mrb[0].mxu0 %v1090
          %v1189 = vpop.f32.mrb[0].mxu0
          %v1190 = vadd.f32 0.0, %v1189
          %v1191 = vpop.f32.mrb[0].mxu0
          %v1192 = vpop.f32.mrb[0].mxu0
          %v1193 = vadd.f32 0.0, %v1192
          %v1194 = vpop.f32.mrb[0].mxu0
          %1195 = vdwg.mxu0
          %v1196 = vadd.f32 %v1023, %v1134
          %v1197 = vadd.f32 %v1024, %v1137
          %v1198 = vadd.f32 %v1025, %v1142
          %v1199 = vadd.f32 %v1026, %v1145
          %v1200 = vadd.f32 %v1027, %v1150
          %v1201 = vadd.f32 %v1028, %v1153
          %v1202 = vadd.f32 %v1029, %v1158
          %v1203 = vadd.f32 %v1030, %v1161
          %v1204 = vadd.f32 %v1031, %v1166
          %v1205 = vadd.f32 %v1032, %v1169
          %v1206 = vadd.f32 %v1033, %v1174
          %v1207 = vadd.f32 %v1034, %v1177
          %v1208 = vadd.f32 %v1035, %v1182
          %v1209 = vadd.f32 %v1036, %v1185
          %v1210 = vadd.f32 %v1037, %v1190
          %v1211 = vadd.f32 %v1038, %v1193
          %1212 = vst [vmem:[#allocation4] sm:$0xff] %v1196
          %1213 = vst [vmem:[#allocation4 + $0x8] sm:$0xff] %v1197
          %1214 = vst [vmem:[#allocation4 + $0x10] sm:$0xff] %v1198
          %1215 = vst [vmem:[#allocation4 + $0x18] sm:$0xff] %v1199
          %1216 = vst [vmem:[#allocation4 + $0x20] sm:$0xff] %v1200
          %1217 = vst [vmem:[#allocation4 + $0x28] sm:$0xff] %v1201
          %1218 = vst [vmem:[#allocation4 + $0x30] sm:$0xff] %v1202
          %1219 = vst [vmem:[#allocation4 + $0x38] sm:$0xff] %v1203
          %1220 = vst [vmem:[#allocation4 + $0x40] sm:$0xff] %v1204
          %1221 = vst [vmem:[#allocation4 + $0x48] sm:$0xff] %v1205
          %1222 = vst [vmem:[#allocation4 + $0x50] sm:$0xff] %v1206
          %1223 = vst [vmem:[#allocation4 + $0x58] sm:$0xff] %v1207
          %1224 = vst [vmem:[#allocation4 + $0x60] sm:$0xff] %v1208
          %1225 = vst [vmem:[#allocation4 + $0x68] sm:$0xff] %v1209
          %1226 = vst [vmem:[#allocation4 + $0x70] sm:$0xff] %v1210
          %1227 = vst [vmem:[#allocation4 + $0x78] sm:$0xff] %v1211
          // Predicated region
          $region93: #{tpu_custom_call.1} parent=87 // pred_check
            %p1228 = pneg %p1003
          $region94: #{tpu_custom_call.1} parent=87 // pred_check_branch
            %1230 = sbr.rel (%p1228) target = $region96
          $region95: #{tpu_custom_call.1} parent=87 // pred_region
            %v1231 = vld [vmem:[#allocation4] sm:$0xff]
            %v1232 = vld [vmem:[#allocation4 + $0x8] sm:$0xff]
            %v1233 = vld [vmem:[#allocation4 + $0x10] sm:$0xff]
            %v1234 = vld [vmem:[#allocation4 + $0x18] sm:$0xff]
            %v1235 = vld [vmem:[#allocation4 + $0x20] sm:$0xff]
            %v1236 = vld [vmem:[#allocation4 + $0x28] sm:$0xff]
            %v1237 = vld [vmem:[#allocation4 + $0x30] sm:$0xff]
            %v1238 = vld [vmem:[#allocation4 + $0x38] sm:$0xff]
            %v1239 = vld [vmem:[#allocation4 + $0x40] sm:$0xff]
            %v1240 = vld [vmem:[#allocation4 + $0x48] sm:$0xff]
            %v1241 = vld [vmem:[#allocation4 + $0x50] sm:$0xff]
            %v1242 = vld [vmem:[#allocation4 + $0x58] sm:$0xff]
            %v1243 = vld [vmem:[#allocation4 + $0x60] sm:$0xff]
            %v1244 = vld [vmem:[#allocation4 + $0x68] sm:$0xff]
            %v1245 = vld [vmem:[#allocation4 + $0x70] sm:$0xff]
            %v1246 = vld [vmem:[#allocation4 + $0x78] sm:$0xff]
            %v1247 = vpack.c.bf16 %v1232, %v1231
            %v1248 = vpack.c.bf16 %v1234, %v1233
            %v1249 = vpack.c.bf16 %v1236, %v1235
            %v1250 = vpack.c.bf16 %v1238, %v1237
            %v1251 = vpack.c.bf16 %v1240, %v1239
            %v1252 = vpack.c.bf16 %v1242, %v1241
            %v1253 = vpack.c.bf16 %v1244, %v1243
            %v1254 = vpack.c.bf16 %v1246, %v1245
            %v1255 = vld [vmem:[#allocation11] sm:$0xf]
            %v1256 = vld [vmem:[#allocation11 + $0x4] sm:$0xf]
            %v1257 = vld [vmem:[#allocation11 + $0x8] sm:$0xf]
            %v1258 = vld [vmem:[#allocation11 + $0xc] sm:$0xf]
            %v1259 = vld [vmem:[#allocation11 + $0x10] sm:$0xf]
            %v1260 = vld [vmem:[#allocation11 + $0x14] sm:$0xf]
            %v1261 = vld [vmem:[#allocation11 + $0x18] sm:$0xf]
            %v1262 = vld [vmem:[#allocation11 + $0x1c] sm:$0xf]
            %v1263 = vld [vmem:[#allocation11 + $0x20] sm:$0xf]
            %v1264 = vld [vmem:[#allocation11 + $0x24] sm:$0xf]
            %v1265 = vld [vmem:[#allocation11 + $0x28] sm:$0xf]
            %v1266 = vld [vmem:[#allocation11 + $0x2c] sm:$0xf]
            %v1267 = vld [vmem:[#allocation11 + $0x30] sm:$0xf]
            %v1268 = vld [vmem:[#allocation11 + $0x34] sm:$0xf]
            %v1269 = vld [vmem:[#allocation11 + $0x38] sm:$0xf]
            %v1270 = vld [vmem:[#allocation11 + $0x3c] sm:$0xf]
            %v1271 = vld [vmem:[%s5] sm:$0x1]
            %v1273 = vlaneseq
            %v1274 = vshrl.u32 %v1273, 7
            %v1275 = vsub.s32 0, %v1274
            %v1276 = vrot.slane %v1271, %v1275
            %v1294 = vunpack.c.l.b16 %v1255
            %v1295 = vunpack.c.l.b16 %v1256
            %v1296 = vunpack.c.l.b16 %v1257
            %v1297 = vunpack.c.l.b16 %v1258
            %v1298 = vunpack.c.l.b16 %v1259
            %v1299 = vunpack.c.l.b16 %v1260
            %v1300 = vunpack.c.l.b16 %v1261
            %v1301 = vunpack.c.l.b16 %v1262
            %v1302 = vunpack.c.l.b16 %v1263
            %v1303 = vunpack.c.l.b16 %v1264
            %v1304 = vunpack.c.l.b16 %v1265
            %v1305 = vunpack.c.l.b16 %v1266
            %v1306 = vunpack.c.l.b16 %v1267
            %v1307 = vunpack.c.l.b16 %v1268
            %v1308 = vunpack.c.l.b16 %v1269
            %v1309 = vunpack.c.l.b16 %v1270
            %v1310 = vpack.c.b16 %v1295, %v1294
            %v1311 = vpack.c.b16 %v1297, %v1296
            %v1312 = vpack.c.b16 %v1299, %v1298
            %v1313 = vpack.c.b16 %v1301, %v1300
            %v1314 = vpack.c.b16 %v1303, %v1302
            %v1315 = vpack.c.b16 %v1305, %v1304
            %v1316 = vpack.c.b16 %v1307, %v1306
            %v1317 = vpack.c.b16 %v1309, %v1308
            %1326 = vmatprep.subr.bf16.mxu0 0
            %1327 = vmatpush1.bf16.msra.mxu0 %v1310
            %1328 = vmatprep.subr.bf16.mxu0 0
            %1329 = vmatpush1.bf16.msra.mxu0 %v1311
            %1330 = vmatprep.subr.bf16.mxu0 0
            %1331 = vmatpush1.bf16.msra.mxu0 %v1312
            %1332 = vmatprep.subr.bf16.mxu0 0
            %1333 = vmatpush1.bf16.msra.mxu0 %v1313
            %1334 = vmatprep.subr.bf16.mxu0 0
            %1335 = vmatpush1.bf16.msra.mxu0 %v1314
            %1336 = vmatprep.subr.bf16.mxu0 0
            %1337 = vmatpush1.bf16.msra.mxu0 %v1315
            %1338 = vmatprep.subr.bf16.mxu0 0
            %1339 = vmatpush1.bf16.msra.mxu0 %v1316
            %1340 = vmatprep.subr.bf16.mxu0 0
            %1341 = vmatpush1.bf16.msra.mxu0 %v1317
            %1342 = vmatprep.subr.bf16.mxu0 0
            %1343 = vmatpush1.bf16.msra.mxu0 0
            %1344 = vmatprep.subr.bf16.mxu0 0
            %1345 = vmatpush1.bf16.msra.mxu0 0
            %1346 = vmatprep.subr.bf16.mxu0 0
            %1347 = vmatpush1.bf16.msra.mxu0 0
            %1348 = vmatprep.subr.bf16.mxu0 0
            %1349 = vmatpush1.bf16.msra.mxu0 0
            %1350 = vmatprep.subr.bf16.mxu0 0
            %1351 = vmatpush1.bf16.msra.mxu0 0
            %1352 = vmatprep.subr.bf16.mxu0 0
            %1353 = vmatpush1.bf16.msra.mxu0 0
            %1354 = vmatprep.subr.bf16.mxu0 0
            %1355 = vmatpush1.bf16.msra.mxu0 0
            %1356 = vmatprep.subr.bf16.mxu0 0
            %1357 = vmatpush1.bf16.msra.mxu0 0
            %1358 = vmatprep.mubr.bf16.mxu0 0
            %1359 = vmatmul.mubr.bf16.gmra.mrb[0].mxu0 %v1247
            %v1360 = vpop.f32.mrb[0].mxu0
            %v1361 = vadd.f32 %v1276, %v1360
            %v1362 = vpop.f32.mrb[0].mxu0
            %v1363 = vpop.f32.mrb[0].mxu0
            %v1364 = vadd.f32 %v1276, %v1363
            %v1365 = vpop.f32.mrb[0].mxu0
            %1366 = vmatprep.mubr.bf16.mxu0 0
            %1367 = vmatmul.mubr.bf16.gmra.mrb[0].mxu0 %v1248
            %v1368 = vpop.f32.mrb[0].mxu0
            %v1369 = vadd.f32 %v1276, %v1368
            %v1370 = vpop.f32.mrb[0].mxu0
            %v1371 = vpop.f32.mrb[0].mxu0
            %v1372 = vadd.f32 %v1276, %v1371
            %v1373 = vpop.f32.mrb[0].mxu0
            %1374 = vmatprep.mubr.bf16.mxu0 0
            %1375 = vmatmul.mubr.bf16.gmra.mrb[0].mxu0 %v1249
            %v1376 = vpop.f32.mrb[0].mxu0
            %v1377 = vadd.f32 %v1276, %v1376
            %v1378 = vpop.f32.mrb[0].mxu0
            %v1379 = vpop.f32.mrb[0].mxu0
            %v1380 = vadd.f32 %v1276, %v1379
            %v1381 = vpop.f32.mrb[0].mxu0
            %1382 = vmatprep.mubr.bf16.mxu0 0
            %1383 = vmatmul.mubr.bf16.gmra.mrb[0].mxu0 %v1250
            %v1384 = vpop.f32.mrb[0].mxu0
            %v1385 = vadd.f32 %v1276, %v1384
            %v1386 = vpop.f32.mrb[0].mxu0
            %v1387 = vpop.f32.mrb[0].mxu0
            %v1388 = vadd.f32 %v1276, %v1387
            %v1389 = vpop.f32.mrb[0].mxu0
            %1390 = vmatprep.mubr.bf16.mxu0 0
            %1391 = vmatmul.mubr.bf16.gmra.mrb[0].mxu0 %v1251
            %v1392 = vpop.f32.mrb[0].mxu0
            %v1393 = vadd.f32 %v1276, %v1392
            %v1394 = vpop.f32.mrb[0].mxu0
            %v1395 = vpop.f32.mrb[0].mxu0
            %v1396 = vadd.f32 %v1276, %v1395
            %v1397 = vpop.f32.mrb[0].mxu0
            %1398 = vmatprep.mubr.bf16.mxu0 0
            %1399 = vmatmul.mubr.bf16.gmra.mrb[0].mxu0 %v1252
            %v1400 = vpop.f32.mrb[0].mxu0
            %v1401 = vadd.f32 %v1276, %v1400
            %v1402 = vpop.f32.mrb[0].mxu0
            %v1403 = vpop.f32.mrb[0].mxu0
            %v1404 = vadd.f32 %v1276, %v1403
            %v1405 = vpop.f32.mrb[0].mxu0
            %1406 = vmatprep.mubr.bf16.mxu0 0
            %1407 = vmatmul.mubr.bf16.gmra.mrb[0].mxu0 %v1253
            %v1408 = vpop.f32.mrb[0].mxu0
            %v1409 = vadd.f32 %v1276, %v1408
            %v1410 = vpop.f32.mrb[0].mxu0
            %v1411 = vpop.f32.mrb[0].mxu0
            %v1412 = vadd.f32 %v1276, %v1411
            %v1413 = vpop.f32.mrb[0].mxu0
            %1414 = vmatprep.mubr.bf16.mxu0 0
            %1415 = vmatmul.mubr.bf16.gmra.mrb[0].mxu0 %v1254
            %v1416 = vpop.f32.mrb[0].mxu0
            %v1417 = vadd.f32 %v1276, %v1416
            %v1418 = vpop.f32.mrb[0].mxu0
            %v1419 = vpop.f32.mrb[0].mxu0
            %v1420 = vadd.f32 %v1276, %v1419
            %v1421 = vpop.f32.mrb[0].mxu0
            %1422 = vdwg.mxu0
            %1423 = vst [vmem:[%s452] sm:$0xff] %v1361
            %1424 = vst [vmem:[%s452 + $0x8] sm:$0xff] %v1364
            %1425 = vst [vmem:[%s452 + $0x10] sm:$0xff] %v1369
            %1426 = vst [vmem:[%s452 + $0x18] sm:$0xff] %v1372
            %1427 = vst [vmem:[%s452 + $0x20] sm:$0xff] %v1377
            %1428 = vst [vmem:[%s452 + $0x28] sm:$0xff] %v1380
            %1429 = vst [vmem:[%s452 + $0x30] sm:$0xff] %v1385
            %1430 = vst [vmem:[%s452 + $0x38] sm:$0xff] %v1388
            %1431 = vst [vmem:[%s452 + $0x40] sm:$0xff] %v1393
            %1432 = vst [vmem:[%s452 + $0x48] sm:$0xff] %v1396
            %1433 = vst [vmem:[%s452 + $0x50] sm:$0xff] %v1401
            %1434 = vst [vmem:[%s452 + $0x58] sm:$0xff] %v1404
            %1435 = vst [vmem:[%s452 + $0x60] sm:$0xff] %v1409
            %1436 = vst [vmem:[%s452 + $0x68] sm:$0xff] %v1412
            %1437 = vst [vmem:[%s452 + $0x70] sm:$0xff] %v1417
            %1438 = vst [vmem:[%s452 + $0x78] sm:$0xff] %v1420
            %v1439 = vpack.c.bf16 %v1364, %v1361
            %v1440 = vpack.c.bf16 %v1372, %v1369
            %v1441 = vpack.c.bf16 %v1380, %v1377
            %v1442 = vpack.c.bf16 %v1388, %v1385
            %v1443 = vpack.c.bf16 %v1396, %v1393
            %v1444 = vpack.c.bf16 %v1404, %v1401
            %v1445 = vpack.c.bf16 %v1412, %v1409
            %v1446 = vpack.c.bf16 %v1420, %v1417
            %v1447 = vld [vmem:[#allocation13] sm:$0xf]
            %v1448 = vld [vmem:[#allocation13 + $0x4] sm:$0xf]
            %v1449 = vld [vmem:[#allocation13 + $0x8] sm:$0xf]
            %v1450 = vld [vmem:[#allocation13 + $0xc] sm:$0xf]
            %v1451 = vld [vmem:[#allocation13 + $0x10] sm:$0xf]
            %v1452 = vld [vmem:[#allocation13 + $0x14] sm:$0xf]
            %v1453 = vld [vmem:[#allocation13 + $0x18] sm:$0xf]
            %v1454 = vld [vmem:[#allocation13 + $0x1c] sm:$0xf]
            %v1455 = vld [vmem:[#allocation13 + $0x20] sm:$0xf]
            %v1456 = vld [vmem:[#allocation13 + $0x24] sm:$0xf]
            %v1457 = vld [vmem:[#allocation13 + $0x28] sm:$0xf]
            %v1458 = vld [vmem:[#allocation13 + $0x2c] sm:$0xf]
            %v1459 = vld [vmem:[#allocation13 + $0x30] sm:$0xf]
            %v1460 = vld [vmem:[#allocation13 + $0x34] sm:$0xf]
            %v1461 = vld [vmem:[#allocation13 + $0x38] sm:$0xf]
            %v1462 = vld [vmem:[#allocation13 + $0x3c] sm:$0xf]
            %v1463 = vld [vmem:[%s7] sm:$0x1]
            %v1465 = vlaneseq
            %v1466 = vshrl.u32 %v1465, 7
            %v1467 = vsub.s32 0, %v1466
            %v1468 = vrot.slane %v1463, %v1467
            %v1486 = vunpack.c.l.b16 %v1447
            %v1487 = vunpack.c.l.b16 %v1448
            %v1488 = vunpack.c.l.b16 %v1449
            %v1489 = vunpack.c.l.b16 %v1450
            %v1490 = vunpack.c.l.b16 %v1451
            %v1491 = vunpack.c.l.b16 %v1452
            %v1492 = vunpack.c.l.b16 %v1453
            %v1493 = vunpack.c.l.b16 %v1454
            %v1494 = vunpack.c.l.b16 %v1455
            %v1495 = vunpack.c.l.b16 %v1456
            %v1496 = vunpack.c.l.b16 %v1457
            %v1497 = vunpack.c.l.b16 %v1458
            %v1498 = vunpack.c.l.b16 %v1459
            %v1499 = vunpack.c.l.b16 %v1460
            %v1500 = vunpack.c.l.b16 %v1461
            %v1501 = vunpack.c.l.b16 %v1462
            %v1502 = vpack.c.b16 %v1487, %v1486
            %v1503 = vpack.c.b16 %v1489, %v1488
            %v1504 = vpack.c.b16 %v1491, %v1490
            %v1505 = vpack.c.b16 %v1493, %v1492
            %v1506 = vpack.c.b16 %v1495, %v1494
            %v1507 = vpack.c.b16 %v1497, %v1496
            %v1508 = vpack.c.b16 %v1499, %v1498
            %v1509 = vpack.c.b16 %v1501, %v1500
            %1518 = vmatprep.subr.bf16.mxu0 0
            %1519 = vmatpush1.bf16.msra.mxu0 %v1502
            %1520 = vmatprep.subr.bf16.mxu0 0
            %1521 = vmatpush1.bf16.msra.mxu0 %v1503
            %1522 = vmatprep.subr.bf16.mxu0 0
            %1523 = vmatpush1.bf16.msra.mxu0 %v1504
            %1524 = vmatprep.subr.bf16.mxu0 0
            %1525 = vmatpush1.bf16.msra.mxu0 %v1505
            %1526 = vmatprep.subr.bf16.mxu0 0
            %1527 = vmatpush1.bf16.msra.mxu0 %v1506
            %1528 = vmatprep.subr.bf16.mxu0 0
            %1529 = vmatpush1.bf16.msra.mxu0 %v1507
            %1530 = vmatprep.subr.bf16.mxu0 0
            %1531 = vmatpush1.bf16.msra.mxu0 %v1508
            %1532 = vmatprep.subr.bf16.mxu0 0
            %1533 = vmatpush1.bf16.msra.mxu0 %v1509
            %1534 = vmatprep.subr.bf16.mxu0 0
            %1535 = vmatpush1.bf16.msra.mxu0 0
            %1536 = vmatprep.subr.bf16.mxu0 0
            %1537 = vmatpush1.bf16.msra.mxu0 0
            %1538 = vmatprep.subr.bf16.mxu0 0
            %1539 = vmatpush1.bf16.msra.mxu0 0
            %1540 = vmatprep.subr.bf16.mxu0 0
            %1541 = vmatpush1.bf16.msra.mxu0 0
            %1542 = vmatprep.subr.bf16.mxu0 0
            %1543 = vmatpush1.bf16.msra.mxu0 0
            %1544 = vmatprep.subr.bf16.mxu0 0
            %1545 = vmatpush1.bf16.msra.mxu0 0
            %1546 = vmatprep.subr.bf16.mxu0 0
            %1547 = vmatpush1.bf16.msra.mxu0 0
            %1548 = vmatprep.subr.bf16.mxu0 0
            %1549 = vmatpush1.bf16.msra.mxu0 0
            %1550 = vmatprep.mubr.bf16.mxu0 0
            %1551 = vmatmul.mubr.bf16.gmra.mrb[0].mxu0 %v1439
            %v1552 = vpop.f32.mrb[0].mxu0
            %v1553 = vadd.f32 %v1468, %v1552
            %v1554 = vpop.f32.mrb[0].mxu0
            %v1555 = vpop.f32.mrb[0].mxu0
            %v1556 = vadd.f32 %v1468, %v1555
            %v1557 = vpop.f32.mrb[0].mxu0
            %1558 = vmatprep.mubr.bf16.mxu0 0
            %1559 = vmatmul.mubr.bf16.gmra.mrb[0].mxu0 %v1440
            %v1560 = vpop.f32.mrb[0].mxu0
            %v1561 = vadd.f32 %v1468, %v1560
            %v1562 = vpop.f32.mrb[0].mxu0
            %v1563 = vpop.f32.mrb[0].mxu0
            %v1564 = vadd.f32 %v1468, %v1563
            %v1565 = vpop.f32.mrb[0].mxu0
            %1566 = vmatprep.mubr.bf16.mxu0 0
            %1567 = vmatmul.mubr.bf16.gmra.mrb[0].mxu0 %v1441
            %v1568 = vpop.f32.mrb[0].mxu0
            %v1569 = vadd.f32 %v1468, %v1568
            %v1570 = vpop.f32.mrb[0].mxu0
            %v1571 = vpop.f32.mrb[0].mxu0
            %v1572 = vadd.f32 %v1468, %v1571
            %v1573 = vpop.f32.mrb[0].mxu0
            %1574 = vmatprep.mubr.bf16.mxu0 0
            %1575 = vmatmul.mubr.bf16.gmra.mrb[0].mxu0 %v1442
            %v1576 = vpop.f32.mrb[0].mxu0
            %v1577 = vadd.f32 %v1468, %v1576
            %v1578 = vpop.f32.mrb[0].mxu0
            %v1579 = vpop.f32.mrb[0].mxu0
            %v1580 = vadd.f32 %v1468, %v1579
            %v1581 = vpop.f32.mrb[0].mxu0
            %1582 = vmatprep.mubr.bf16.mxu0 0
            %1583 = vmatmul.mubr.bf16.gmra.mrb[0].mxu0 %v1443
            %v1584 = vpop.f32.mrb[0].mxu0
            %v1585 = vadd.f32 %v1468, %v1584
            %v1586 = vpop.f32.mrb[0].mxu0
            %v1587 = vpop.f32.mrb[0].mxu0
            %v1588 = vadd.f32 %v1468, %v1587
            %v1589 = vpop.f32.mrb[0].mxu0
            %1590 = vmatprep.mubr.bf16.mxu0 0
            %1591 = vmatmul.mubr.bf16.gmra.mrb[0].mxu0 %v1444
            %v1592 = vpop.f32.mrb[0].mxu0
            %v1593 = vadd.f32 %v1468, %v1592
            %v1594 = vpop.f32.mrb[0].mxu0
            %v1595 = vpop.f32.mrb[0].mxu0
            %v1596 = vadd.f32 %v1468, %v1595
            %v1597 = vpop.f32.mrb[0].mxu0
            %1598 = vmatprep.mubr.bf16.mxu0 0
            %1599 = vmatmul.mubr.bf16.gmra.mrb[0].mxu0 %v1445
            %v1600 = vpop.f32.mrb[0].mxu0
            %v1601 = vadd.f32 %v1468, %v1600
            %v1602 = vpop.f32.mrb[0].mxu0
            %v1603 = vpop.f32.mrb[0].mxu0
            %v1604 = vadd.f32 %v1468, %v1603
            %v1605 = vpop.f32.mrb[0].mxu0
            %1606 = vmatprep.mubr.bf16.mxu0 0
            %1607 = vmatmul.mubr.bf16.gmra.mrb[0].mxu0 %v1446
            %v1608 = vpop.f32.mrb[0].mxu0
            %v1609 = vadd.f32 %v1468, %v1608
            %v1610 = vpop.f32.mrb[0].mxu0
            %v1611 = vpop.f32.mrb[0].mxu0
            %v1612 = vadd.f32 %v1468, %v1611
            %v1613 = vpop.f32.mrb[0].mxu0
            %1614 = vdwg.mxu0
            %1615 = vst [vmem:[%s459] sm:$0xff] %v1553
            %1616 = vst [vmem:[%s459 + $0x8] sm:$0xff] %v1556
            %1617 = vst [vmem:[%s459 + $0x10] sm:$0xff] %v1561
            %1618 = vst [vmem:[%s459 + $0x18] sm:$0xff] %v1564
            %1619 = vst [vmem:[%s459 + $0x20] sm:$0xff] %v1569
            %1620 = vst [vmem:[%s459 + $0x28] sm:$0xff] %v1572
            %1621 = vst [vmem:[%s459 + $0x30] sm:$0xff] %v1577
            %1622 = vst [vmem:[%s459 + $0x38] sm:$0xff] %v1580
            %1623 = vst [vmem:[%s459 + $0x40] sm:$0xff] %v1585
            %1624 = vst [vmem:[%s459 + $0x48] sm:$0xff] %v1588
            %1625 = vst [vmem:[%s459 + $0x50] sm:$0xff] %v1593
            %1626 = vst [vmem:[%s459 + $0x58] sm:$0xff] %v1596
            %1627 = vst [vmem:[%s459 + $0x60] sm:$0xff] %v1601
            %1628 = vst [vmem:[%s459 + $0x68] sm:$0xff] %v1604
            %1629 = vst [vmem:[%s459 + $0x70] sm:$0xff] %v1609
            %1630 = vst [vmem:[%s459 + $0x78] sm:$0xff] %v1612
          $region96: #{tpu_custom_call.1} parent=87 // pred_fallthru
            _
        $region88: #{tpu_custom_call.1} parent=51 // pred_fallthru
          _
        %s1631 = sand.u32 %s245, 1
        %s1632 = scalar_lea.sflag [#allocation7], %s1631
        %s1633 = sand.u32 %s245, 1
        %s1634 = smul.addr %s1633, 128
        %s1635 = scalar_lea.vmem [#allocation14], %s1634
        %s1636 = sand.u32 %s273, 1
        %s1637 = scalar_lea.sflag [#allocation16], %s1636
        %s1638 = sand.u32 %s273, 1
        %s1639 = smul.addr %s1638, 128
        %s1640 = scalar_lea.vmem [#allocation15], %s1639
        // Predicated region
        $region97: #{tpu_custom_call.1} parent=51 // pred_check
          %p1641 = pneg %p255
        $region98: #{tpu_custom_call.1} parent=51 // pred_check_branch
          %1643 = sbr.rel (%p1641) target = $region100
        $region99: #{tpu_custom_call.1} parent=51 // pred_region
          %s1644 = smul.u32 %s38, %s37
          %s1645 = smul.u32 16, %s1644
          %s1647 = ssub.s32 2048, 2048
          %1648 = vsyncadd %s1632, %s1647
          %s1649 = smul.addr %s1645, 128
          %s1650 = scalar_lea.hbm %s8, %s1649
          %s1651 = sshll.u32 %s1635, 4
          %s1652 = int_to_ptr.vmem [resolvable:$true] %s1651
          %1657 = dma.vmem_to_hbm [thread:$0]  %s1652, 2048, %s1650, %s1632, 128, 128, 8
        $region100: #{tpu_custom_call.1} parent=51 // pred_fallthru
          _
        // Predicated region
        $region101: #{tpu_custom_call.1} parent=51 // pred_check
          %p1658 = pneg %p283
        $region102: #{tpu_custom_call.1} parent=51 // pred_check_branch
          %1660 = sbr.rel (%p1658) target = $region104
        $region103: #{tpu_custom_call.1} parent=51 // pred_region
          %s1661 = smul.u32 %s38, %s37
          %s1662 = smul.u32 16, %s1661
          %s1664 = ssub.s32 2048, 2048
          %1665 = vsyncadd %s1637, %s1664
          %s1666 = smul.addr %s1662, 128
          %s1667 = scalar_lea.hbm %s9, %s1666
          %s1668 = sshll.u32 %s1640, 4
          %s1669 = int_to_ptr.vmem [resolvable:$true] %s1668
          %1674 = dma.vmem_to_hbm [thread:$0]  %s1669, 2048, %s1667, %s1637, 128, 128, 8
        $region104: #{tpu_custom_call.1} parent=51 // pred_fallthru
          _
      $region52: #{tpu_custom_call.1} parent=5 // pred_fallthru
        _
      %p1675 = scmp.le.s32.totalorder 2, %s27
      // Predicated region
      $region105: #{tpu_custom_call.1} parent=5 // pred_check
        %p1676 = pneg %p1675
      $region106: #{tpu_custom_call.1} parent=5 // pred_check_branch
        %1678 = sbr.rel (%p1676) target = $region108
      $region107: #{tpu_custom_call.1} parent=5 // pred_region
        %s1679 = ssub.s32 %s27, 2
        // Predicated region
        $region109: #{tpu_custom_call.1} parent=107 // pred_check
          %p1680 = pneg %p261
        $region110: #{tpu_custom_call.1} parent=107 // pred_check_branch
          %1682 = sbr.rel (%p1680) target = $region112
        $region111: #{tpu_custom_call.1} parent=107 // pred_region
          %s1683 = sand.u32 %s246, 1
          %s1684 = scalar_lea.sflag [#allocation7], %s1683
          %s1685 = sand.u32 %s246, 1
          %s1686 = smul.addr %s1685, 128
          %s1687 = scalar_lea.vmem [#allocation14], %s1686
          %1688 = dma.done %s1684, 2048
        $region112: #{tpu_custom_call.1} parent=107 // pred_fallthru
          _
        // Predicated region
        $region113: #{tpu_custom_call.1} parent=107 // pred_check
          %p1689 = pneg %p289
        $region114: #{tpu_custom_call.1} parent=107 // pred_check_branch
          %1691 = sbr.rel (%p1689) target = $region116
        $region115: #{tpu_custom_call.1} parent=107 // pred_region
          %s1692 = sand.u32 %s274, 1
          %s1693 = scalar_lea.sflag [#allocation16], %s1692
          %s1694 = sand.u32 %s274, 1
          %s1695 = smul.addr %s1694, 128
          %s1696 = scalar_lea.vmem [#allocation15], %s1695
          %1697 = dma.done %s1693, 2048
        $region116: #{tpu_custom_call.1} parent=107 // pred_fallthru
          _
      $region108: #{tpu_custom_call.1} parent=5 // pred_fallthru
        _
    $region6: #{tpu_custom_call.1} parent=1 // loop_footer
      %s31 = sadd.s32 1, %s27
    $region7: #{tpu_custom_call.1} parent=1 // loop_footer_branch
      %26 = sbr.rel target = $region3
    $region8: #{tpu_custom_call.1} parent=1 // loop_exit
      _
    %1698 = vsyncpa [#allocation6], 1
    %s1699 = scalar_lea.sflag [#allocation6], 1
    %1700 = vsyncpa %s1699, 1
    %1701 = vsyncpa [#allocation9], 1
    %s1702 = scalar_lea.sflag [#allocation9], 1
    %1703 = vsyncpa %s1702, 1
    %1704 = vsyncpa [#allocation12], 1
    %1705 = vsyncpa [#allocation7], 1
    %s1706 = scalar_lea.sflag [#allocation7], 1
    %1707 = vsyncpa %s1706, 1
    %1708 = vsyncpa [#allocation16], 1
    %s1709 = scalar_lea.sflag [#allocation16], 1
    %1710 = vsyncpa %s1709, 1

</llo_original>
